<compile_context>
chip_gen: v7x
topology: tpu7x:2x2x1
jax: 0.10.0
libtpu: 0.0.40
codegen_flags: <defaults>
</compile_context>

<pallas_src>
import functools

import jax
import jax.numpy as jnp
from jax.experimental import pallas as pl
from jax.experimental.pallas import tpu as pltpu


# ---------------------------------------------------------------------------
# Parameter setup (plain JAX glue)
# ---------------------------------------------------------------------------
def init_params(key, in_channels, out_channels, init_scale=1.0):
    ks = jax.random.split(key, 6)
    p = {}
    # nn.BatchNorm2d(in_channels): gamma=1, beta=0, running_mean=0, running_var=1
    p['bn1_gamma'] = jnp.ones((in_channels,), jnp.float32)
    p['bn1_beta'] = jnp.zeros((in_channels,), jnp.float32)
    p['bn1_mean'] = jnp.zeros((in_channels,), jnp.float32)
    p['bn1_var'] = jnp.ones((in_channels,), jnp.float32)
    # bn_init(bn2, 1): gamma=1, beta=0
    p['bn2_gamma'] = jnp.ones((out_channels,), jnp.float32)
    p['bn2_beta'] = jnp.zeros((out_channels,), jnp.float32)
    p['bn2_mean'] = jnp.zeros((out_channels,), jnp.float32)
    p['bn2_var'] = jnp.ones((out_channels,), jnp.float32)
    # Shift(channel, stride, init_scale): xpos ~ U(-1e-8, 1e-8), ypos ~ U(-s, s)
    p['shift_in_xpos'] = jax.random.uniform(ks[0], (in_channels,),
                                            minval=-1e-8, maxval=1e-8)
    p['shift_in_ypos'] = jax.random.uniform(ks[1], (in_channels,),
                                            minval=-init_scale, maxval=init_scale)
    p['shift_out_xpos'] = jax.random.uniform(ks[2], (out_channels,),
                                             minval=-1e-8, maxval=1e-8)
    p['shift_out_ypos'] = jax.random.uniform(ks[3], (out_channels,),
                                             minval=-init_scale, maxval=init_scale)
    # nn.Conv2d(in, out, 1), kaiming_normal(mode='fan_out'): std = sqrt(2 / out)
    std = (2.0 / out_channels) ** 0.5
    p['conv_w'] = std * jax.random.normal(ks[4], (out_channels, in_channels, 1, 1),
                                          jnp.float32)
    bound = 1.0 / (in_channels ** 0.5)
    p['conv_b'] = jax.random.uniform(ks[5], (out_channels,),
                                     minval=-bound, maxval=bound).astype(jnp.float32)
    return p


# ---------------------------------------------------------------------------
# Two-tap window weights for the fractional shift (host-side)
# ---------------------------------------------------------------------------
def _derive_K(params):
    """Minimal tap half-width covering every floor(shift) in the params."""
    shifts = jnp.concatenate([params['shift_in_ypos'], params['shift_in_xpos'],
                              params['shift_out_ypos'], params['shift_out_xpos']])
    fl = jnp.floor(shifts)
    return max(int(-jnp.min(fl)), int(jnp.max(fl)), 0)


def _window_weights(shift, K):
    """Per-channel tap weights over offsets k = -K .. K+1.

    y[t] = (1-frac)*x[t + floor(s)] + frac*x[t + floor(s) + 1]  (zero padded),
    with floor(s) clamped to [-K, K].  Returns (2K+2, C) float32.
    (K from _derive_K covers all floors, so the clamp never triggers.)
    """
    shift = shift.astype(jnp.float32)
    i0 = jnp.floor(shift)
    frac = shift - i0
    i0 = jnp.clip(i0, -float(K), float(K))
    offs = jnp.arange(-K, K + 2, dtype=jnp.float32)[:, None]          # (W, 1)
    w = ((offs == i0[None, :]).astype(jnp.float32) * (1.0 - frac)[None, :]
         + (offs == (i0 + 1.0)[None, :]).astype(jnp.float32) * frac[None, :])
    return w                                                           # (W, C)


def _dense_from_window(w, K, src_len, dst_len, stride):
    """Dense (C, dst, src) shift operator from window weights (reference only)."""
    offs = jnp.arange(-K, K + 2)
    t = jnp.arange(dst_len)
    src = t[None, :] * stride + offs[:, None]                          # (W, dst)
    valid = (src >= 0) & (src < src_len)
    srcc = jnp.clip(src, 0, src_len - 1)
    onehot = (srcc[:, :, None] == jnp.arange(src_len)[None, None, :]) & valid[:, :, None]
    return jnp.einsum('wc,wtu->ctu', w, onehot.astype(jnp.float32))


def _prepare_kernel_params(params, T, V, K, conv_dtype):
    """Fold BN scales and build lane-friendly kernel operands."""
    eps = 1e-5
    scale1 = params['bn1_gamma'] * jax.lax.rsqrt(params['bn1_var'] + eps)
    bias1 = params['bn1_beta'] - params['bn1_mean'] * scale1
    scale2 = params['bn2_gamma'] * jax.lax.rsqrt(params['bn2_var'] + eps)
    bias2 = params['bn2_beta'] - params['bn2_mean'] * scale2

    wt_in = _window_weights(params['shift_in_ypos'], K)               # (W, Cin)
    wv_in = _window_weights(params['shift_in_xpos'], K)               # (W, Cin)
    # BN2 scale is per-out-channel -> commutes with the per-channel shifts; fold it
    # into the shift_out temporal taps.
    wt_out = _window_weights(params['shift_out_ypos'], K) * scale2[None, :]
    wv_out = _window_weights(params['shift_out_xpos'], K)             # (W, Cout)

    # Per-tap boundary masks over the fused m = v*T + t lane axis (zero padding).
    M = V * T
    offs = jnp.arange(-K, K + 2)
    m = jnp.arange(M)
    t = m % T
    v = m // T
    tmask = ((t[None, :] + offs[:, None] >= 0) &
             (t[None, :] + offs[:, None] < T)).astype(jnp.float32)    # (W, M)
    vmask = ((v[None, :] + offs[:, None] >= 0) &
             (v[None, :] + offs[:, None] < V)).astype(jnp.float32)    # (W, M)

    return dict(
        scale1=scale1[:, None].astype(jnp.float32),       # (Cin, 1)
        bias1=bias1[:, None].astype(jnp.float32),         # (Cin, 1)
        wt_in=wt_in[:, :, None].astype(jnp.float32),      # (W, Cin, 1)
        wv_in=wv_in[:, :, None].astype(jnp.float32),      # (W, Cin, 1)
        tmask=tmask[:, None, :],                          # (W, 1, M)
        vmask=vmask[:, None, :],                          # (W, 1, M)
        w2d=params['conv_w'][:, :, 0, 0].astype(conv_dtype),   # (Cout, Cin)
        conv_b=params['conv_b'][:, None].astype(jnp.float32),  # (Cout, 1)
        wt_out=wt_out[:, :, None].astype(jnp.float32),    # (W, Cout, 1)
        wv_out=wv_out[:, :, None].astype(jnp.float32),    # (W, Cout, 1)
        bias2=bias2[:, None].astype(jnp.float32),         # (Cout, 1)
    )


# ---------------------------------------------------------------------------
# Pallas kernel
# ---------------------------------------------------------------------------
def _tap_blend(x, taps_ref, mask_ref, roll_shifts):
    """Per-channel fractional shift along the fused (lane) axis as a weighted sum
    of whole-array lane rotations (pltpu.roll, XLU) with boundary masks.

    x:          (C, M) or (B, C, M) value, M on lanes.
    taps_ref:   (W, C, 1) per-channel tap weights.
    mask_ref:   (W, 1, M) per-tap source-validity mask (zero-padding semantics).
    roll_shifts: W static lane-rotation amounts.
    """
    lead = x.ndim - 2
    acc = None
    for j, s in enumerate(roll_shifts):
        xr = x if s == 0 else pltpu.roll(x, shift=s, axis=x.ndim - 1)
        w = taps_ref[j]                                   # (C, 1)
        m = mask_ref[j]                                   # (1, M)
        if lead:
            w = w[None]
            m = m[None]
        term = (xr * m) * w
        acc = term if acc is None else acc + term
    return acc


def shift_tcn_kernel(x_ref, scale1_ref, bias1_ref, wt_in_ref, wv_in_ref,
                     tmask_ref, vmask_ref, w_ref, convb_ref,
                     wt_out_ref, wv_out_ref, bias2_ref, o_ref,
                     *, roll_t, roll_v):
    B = x_ref.shape[0]

    # BN1 (inference affine) + shift_in on the whole (B, Cin, M) block.
    x = x_ref[...].astype(jnp.float32)
    y = x * scale1_ref[...][None] + bias1_ref[...][None]
    y = _tap_blend(y, wt_in_ref, tmask_ref, roll_t)       # temporal shift (per Cin)
    y = _tap_blend(y, wv_in_ref, vmask_ref, roll_v)       # vertex   shift (per Cin)

    w = w_ref[...]                                        # (Cout, Cin), bf16
    yb = y.astype(w.dtype)
    convb = convb_ref[...]                                # (Cout, 1)
    bias2 = bias2_ref[...]                                # (Cout, 1)

    # 1x1 conv on the MXU: one (Cout,Cin)@(Cin,V*T) dot per sample (B is tiny),
    # then ReLU, shift_out (BN2 scale folded into the T taps) and BN2 bias,
    # stored straight to the lane-dense output block (no scratch round-trips).
    for b in range(B):
        zb = jnp.dot(w, yb[b], preferred_element_type=jnp.float32)   # (Cout, M)
        zb = jnp.maximum(zb + convb, 0.0)
        zb = _tap_blend(zb, wt_out_ref, tmask_ref, roll_t)
        zb = _tap_blend(zb, wv_out_ref, vmask_ref, roll_v)
        o_ref[b] = (zb + bias2).astype(o_ref.dtype)


def _pick_batch_block(N, Cin, Cout, M, vmem_cap):
    """Largest per-step sample block that fits a conservative VMEM budget while
    keeping >= 2 grid steps (so both v7x TensorCores get parallel work)."""
    budget = int(0.35 * vmem_cap)
    best = 1
    for b in range(1, N + 1):
        if N % b:
            continue
        if N >= 2 and N // b < 2:
            continue
        need = 4 * M * b * (Cin + Cout) * 2          # double-buffered f32 in/out blocks
        need += 4 * M * b * (2 * Cin + 3 * Cout)     # rough in-kernel live values
        if need <= budget:
            best = b
    return best


def shift_tcn_forward(x, params, stride=1, conv_dtype=jnp.bfloat16):
    N, Cin, T, V = x.shape
    Cout = params['conv_w'].shape[0]
    M = V * T
    K = _derive_K(params)
    W = 2 * K + 2

    prep = _prepare_kernel_params(params, T, V, K, conv_dtype)

    # Host-side layout plumbing: (N, Cin, T, V) -> (N, Cin, V*T), t fastest in the
    # fused lane axis (m = v*T + t), matching the precomputed masks.
    x_k = jnp.transpose(x, (0, 1, 3, 2)).reshape(N, Cin, M)

    offs = list(range(-K, K + 2))
    roll_t = tuple((-d) % M for d in offs)
    roll_v = tuple((-d * T) % M for d in offs)

    try:
        vmem_cap = int(getattr(pltpu.get_tpu_info(), 'vmem_capacity_bytes',
                               64 * 1024 * 1024))
    except Exception:
        vmem_cap = 64 * 1024 * 1024

    B_blk = _pick_batch_block(N, Cin, Cout, M, vmem_cap)
    grid = (N // B_blk,)

    args = (x_k, prep['scale1'], prep['bias1'], prep['wt_in'], prep['wv_in'],
            prep['tmask'], prep['vmask'], prep['w2d'], prep['conv_b'],
            prep['wt_out'], prep['wv_out'], prep['bias2'])

    def full_spec(a):
        return pl.BlockSpec(a.shape, lambda n, _nd=a.ndim: (0,) * _nd)

    in_specs = [pl.BlockSpec((B_blk, Cin, M), lambda n: (n, 0, 0))]
    in_specs += [full_spec(a) for a in args[1:]]
    out_specs = pl.BlockSpec((B_blk, Cout, M), lambda n: (n, 0, 0))

    param_bytes = sum(int(a.size) * a.dtype.itemsize for a in args[1:])
    block_bytes = 4 * B_blk * M * (Cin + Cout)
    vmem_limit = int(min(0.7 * vmem_cap,
                         max(32 * 1024 * 1024, 8 * block_bytes + 2 * param_bytes)))

    flops = 2 * N * Cout * Cin * M                      # 1x1 conv on the MXU
    flops += 3 * N * W * M * 2 * (Cin + Cout)           # roll+mask tap blends
    bytes_accessed = (int(x_k.size) * x_k.dtype.itemsize
                      + N * Cout * M * x.dtype.itemsize + param_bytes)

    kernel = functools.partial(shift_tcn_kernel, roll_t=roll_t, roll_v=roll_v)

    out_k = pl.pallas_call(
        kernel,
        out_shape=jax.ShapeDtypeStruct((N, Cout, M), x.dtype),
        grid_spec=pltpu.PrefetchScalarGridSpec(
            num_scalar_prefetch=0,
            grid=grid,
            in_specs=in_specs,
            out_specs=out_specs),
        compiler_params=pltpu.CompilerParams(
            dimension_semantics=("parallel",),
            vmem_limit_bytes=vmem_limit),
        cost_estimate=pl.CostEstimate(flops=int(flops), transcendentals=0,
                                      bytes_accessed=int(bytes_accessed)),
    )(*args)

    out = out_k.reshape(N, Cout, V, T)
    if stride != 1:
        out = out[:, :, :, ::stride]                    # shift_out temporal stride
    # Back to the PyTorch NCHW layout: (N, Cout, V, T_out) -> (N, Cout, T_out, V).
    return jnp.transpose(out, (0, 1, 3, 2))


# ---------------------------------------------------------------------------
# Pure-JAX reference (dense shift operators built from the same tap weights)
# ---------------------------------------------------------------------------
def shift_tcn_reference(x, params, stride=1, conv_dtype=jnp.float32):
    N, Cin, T, V = x.shape
    K = _derive_K(params)
    eps = 1e-5
    scale1 = params['bn1_gamma'] * jax.lax.rsqrt(params['bn1_var'] + eps)
    bias1 = params['bn1_beta'] - params['bn1_mean'] * scale1
    scale2 = params['bn2_gamma'] * jax.lax.rsqrt(params['bn2_var'] + eps)
    bias2 = params['bn2_beta'] - params['bn2_mean'] * scale2

    at_in = _dense_from_window(_window_weights(params['shift_in_ypos'], K), K, T, T, 1)
    av_in = _dense_from_window(_window_weights(params['shift_in_xpos'], K), K, V, V, 1)
    at_out = _dense_from_window(_window_weights(params['shift_out_ypos'], K), K,
                                T, T // stride, stride)
    av_out = _dense_from_window(_window_weights(params['shift_out_xpos'], K), K, V, V, 1)
    w = params['conv_w'][:, :, 0, 0].astype(conv_dtype)

    y = x * scale1[None, :, None, None] + bias1[None, :, None, None]
    y = jnp.einsum('ctu,ncuv->nctv', at_in, y)
    y = jnp.einsum('nctw,cvw->nctv', y, av_in)
    y = jnp.einsum('oc,nctv->notv', w, y.astype(conv_dtype),
                   preferred_element_type=jnp.float32)
    y = y + params['conv_b'][None, :, None, None]
    y = jnp.maximum(y, 0.0)
    y = jnp.einsum('otu,nouv->notv', at_out, y)
    y = jnp.einsum('notw,ovw->notv', y, av_out)
    y = y * scale2[None, :, None, None] + bias2[None, :, None, None]
    return y.astype(x.dtype)


if __name__ == "__main__":
    key = jax.random.PRNGKey(0)
    kx, kp = jax.random.split(key)

    N, Cin, Cout, T, V = 2, 8, 8, 16, 16   # x is NCHW = (N, Cin, T, V)
    stride = 1

    x = jax.random.normal(kx, (N, Cin, T, V), jnp.float32)
    params = init_params(kp, Cin, Cout, init_scale=1.0)

    out = shift_tcn_forward(x, params, stride=stride)
    out = jax.block_until_ready(out)
    assert out.shape == (N, Cout, T // stride, V), out.shape

    # Reference at matching matmul precision (bf16 MXU operands, f32 accumulate).
    ref_bf16 = shift_tcn_reference(x, params, stride=stride, conv_dtype=jnp.bfloat16)
    err = float(jnp.max(jnp.abs(out - ref_bf16)))
    assert jnp.allclose(out, ref_bf16, atol=1e-2, rtol=1e-2), err

    # Loose sanity check against the full-f32 reference (bf16 rounding headroom).
    ref_f32 = shift_tcn_reference(x, params, stride=stride, conv_dtype=jnp.float32)
    err32 = float(jnp.max(jnp.abs(out - ref_f32)))
    assert jnp.allclose(out, ref_f32, atol=1e-1, rtol=1e-1), err32

    print("KERNEL_OK")
</pallas_src>

<mosaic_0001>
module attributes {stable_mosaic.version = 11 : i64} {
  func.func @shift_tcn_kernel(%arg0: i32, %arg1: memref<1x8x256xf32, #tpu.memory_space<vmem>>, %arg2: memref<8x1xf32, #tpu.memory_space<vmem>>, %arg3: memref<8x1xf32, #tpu.memory_space<vmem>>, %arg4: memref<4x8x1xf32, #tpu.memory_space<vmem>>, %arg5: memref<4x8x1xf32, #tpu.memory_space<vmem>>, %arg6: memref<4x1x256xf32, #tpu.memory_space<vmem>>, %arg7: memref<4x1x256xf32, #tpu.memory_space<vmem>>, %arg8: memref<8x8xbf16, #tpu.memory_space<vmem>>, %arg9: memref<8x1xf32, #tpu.memory_space<vmem>>, %arg10: memref<4x8x1xf32, #tpu.memory_space<vmem>>, %arg11: memref<4x8x1xf32, #tpu.memory_space<vmem>>, %arg12: memref<8x1xf32, #tpu.memory_space<vmem>>, %arg13: memref<1x8x256xf32, #tpu.memory_space<vmem>>) attributes {dimension_semantics = [#tpu.dimension_semantics<parallel>], iteration_bounds = array<i64: 2>, scalar_prefetch = 0 : i64, scratch_operands = 0 : i64, tpu.core_type = #tpu.core_type<tc>, window_params = [{transform_indices = @transform_0, window_bounds = array<i64: 1, 8, 256>}, {pipeline_mode = #tpu.pipeline_mode<synchronous>, transform_indices = @transform_1, window_bounds = array<i64: 8, 1>}, {pipeline_mode = #tpu.pipeline_mode<synchronous>, transform_indices = @transform_2, window_bounds = array<i64: 8, 1>}, {pipeline_mode = #tpu.pipeline_mode<synchronous>, transform_indices = @transform_3, window_bounds = array<i64: 4, 8, 1>}, {pipeline_mode = #tpu.pipeline_mode<synchronous>, transform_indices = @transform_4, window_bounds = array<i64: 4, 8, 1>}, {pipeline_mode = #tpu.pipeline_mode<synchronous>, transform_indices = @transform_5, window_bounds = array<i64: 4, 1, 256>}, {pipeline_mode = #tpu.pipeline_mode<synchronous>, transform_indices = @transform_6, window_bounds = array<i64: 4, 1, 256>}, {pipeline_mode = #tpu.pipeline_mode<synchronous>, transform_indices = @transform_7, window_bounds = array<i64: 8, 8>}, {pipeline_mode = #tpu.pipeline_mode<synchronous>, transform_indices = @transform_8, window_bounds = array<i64: 8, 1>}, {pipeline_mode = #tpu.pipeline_mode<synchronous>, transform_indices = @transform_9, window_bounds = array<i64: 4, 8, 1>}, {pipeline_mode = #tpu.pipeline_mode<synchronous>, transform_indices = @transform_10, window_bounds = array<i64: 4, 8, 1>}, {pipeline_mode = #tpu.pipeline_mode<synchronous>, transform_indices = @transform_11, window_bounds = array<i64: 8, 1>}, {transform_indices = @transform_12, window_bounds = array<i64: 1, 8, 256>}]} {
    %c0 = arith.constant 0 : index
    %c0_0 = arith.constant 0 : index
    %c0_1 = arith.constant 0 : index
    %0 = vector.load %arg1[%c0, %c0_0, %c0_1] : memref<1x8x256xf32, #tpu.memory_space<vmem>>, vector<1x8x256xf32>
    %c0_2 = arith.constant 0 : index
    %c0_3 = arith.constant 0 : index
    %1 = vector.load %arg2[%c0_2, %c0_3] : memref<8x1xf32, #tpu.memory_space<vmem>>, vector<8x1xf32>
    %2 = vector.shape_cast %1 : vector<8x1xf32> to vector<1x8x1xf32>
    %3 = vector.broadcast %2 : vector<1x8x1xf32> to vector<1x8x256xf32>
    %4 = arith.mulf %0, %3 : vector<1x8x256xf32>
    %c0_4 = arith.constant 0 : index
    %c0_5 = arith.constant 0 : index
    %5 = vector.load %arg3[%c0_4, %c0_5] : memref<8x1xf32, #tpu.memory_space<vmem>>, vector<8x1xf32>
    %6 = vector.shape_cast %5 : vector<8x1xf32> to vector<1x8x1xf32>
    %7 = vector.broadcast %6 : vector<1x8x1xf32> to vector<1x8x256xf32>
    %8 = arith.addf %4, %7 : vector<1x8x256xf32>
    %c1_i32 = arith.constant 1 : i32
    %9 = tpu.dynamic_rotate %8 by %c1_i32 dim 2 : vector<1x8x256xf32>, i32 -> vector<1x8x256xf32>
    %c0_6 = arith.constant 0 : index
    %c0_7 = arith.constant 0 : index
    %c0_8 = arith.constant 0 : index
    %10 = vector.load %arg4[%c0_6, %c0_7, %c0_8] : memref<4x8x1xf32, #tpu.memory_space<vmem>>, vector<1x8x1xf32>
    %11 = vector.shape_cast %10 : vector<1x8x1xf32> to vector<8x1xf32>
    %c0_9 = arith.constant 0 : index
    %c0_10 = arith.constant 0 : index
    %c0_11 = arith.constant 0 : index
    %12 = vector.load %arg6[%c0_9, %c0_10, %c0_11] : memref<4x1x256xf32, #tpu.memory_space<vmem>>, vector<1x1x256xf32>
    %13 = vector.shape_cast %12 : vector<1x1x256xf32> to vector<1x256xf32>
    %14 = vector.shape_cast %11 : vector<8x1xf32> to vector<1x8x1xf32>
    %15 = vector.shape_cast %13 : vector<1x256xf32> to vector<1x1x256xf32>
    %16 = vector.broadcast %15 : vector<1x1x256xf32> to vector<1x8x256xf32>
    %17 = arith.mulf %9, %16 : vector<1x8x256xf32>
    %18 = vector.broadcast %14 : vector<1x8x1xf32> to vector<1x8x256xf32>
    %19 = arith.mulf %17, %18 : vector<1x8x256xf32>
    %c1 = arith.constant 1 : index
    %c0_12 = arith.constant 0 : index
    %c0_13 = arith.constant 0 : index
    %20 = vector.load %arg4[%c1, %c0_12, %c0_13] : memref<4x8x1xf32, #tpu.memory_space<vmem>>, vector<1x8x1xf32>
    %21 = vector.shape_cast %20 : vector<1x8x1xf32> to vector<8x1xf32>
    %c1_14 = arith.constant 1 : index
    %c0_15 = arith.constant 0 : index
    %c0_16 = arith.constant 0 : index
    %22 = vector.load %arg6[%c1_14, %c0_15, %c0_16] : memref<4x1x256xf32, #tpu.memory_space<vmem>>, vector<1x1x256xf32>
    %23 = vector.shape_cast %22 : vector<1x1x256xf32> to vector<1x256xf32>
    %24 = vector.shape_cast %21 : vector<8x1xf32> to vector<1x8x1xf32>
    %25 = vector.shape_cast %23 : vector<1x256xf32> to vector<1x1x256xf32>
    %26 = vector.broadcast %25 : vector<1x1x256xf32> to vector<1x8x256xf32>
    %27 = arith.mulf %8, %26 : vector<1x8x256xf32>
    %28 = vector.broadcast %24 : vector<1x8x1xf32> to vector<1x8x256xf32>
    %29 = arith.mulf %27, %28 : vector<1x8x256xf32>
    %30 = arith.addf %19, %29 : vector<1x8x256xf32>
    %c255_i32 = arith.constant 255 : i32
    %31 = tpu.dynamic_rotate %8 by %c255_i32 dim 2 : vector<1x8x256xf32>, i32 -> vector<1x8x256xf32>
    %c2 = arith.constant 2 : index
    %c0_17 = arith.constant 0 : index
    %c0_18 = arith.constant 0 : index
    %32 = vector.load %arg4[%c2, %c0_17, %c0_18] : memref<4x8x1xf32, #tpu.memory_space<vmem>>, vector<1x8x1xf32>
    %33 = vector.shape_cast %32 : vector<1x8x1xf32> to vector<8x1xf32>
    %c2_19 = arith.constant 2 : index
    %c0_20 = arith.constant 0 : index
    %c0_21 = arith.constant 0 : index
    %34 = vector.load %arg6[%c2_19, %c0_20, %c0_21] : memref<4x1x256xf32, #tpu.memory_space<vmem>>, vector<1x1x256xf32>
    %35 = vector.shape_cast %34 : vector<1x1x256xf32> to vector<1x256xf32>
    %36 = vector.shape_cast %33 : vector<8x1xf32> to vector<1x8x1xf32>
    %37 = vector.shape_cast %35 : vector<1x256xf32> to vector<1x1x256xf32>
    %38 = vector.broadcast %37 : vector<1x1x256xf32> to vector<1x8x256xf32>
    %39 = arith.mulf %31, %38 : vector<1x8x256xf32>
    %40 = vector.broadcast %36 : vector<1x8x1xf32> to vector<1x8x256xf32>
    %41 = arith.mulf %39, %40 : vector<1x8x256xf32>
    %42 = arith.addf %30, %41 : vector<1x8x256xf32>
    %c254_i32 = arith.constant 254 : i32
    %43 = tpu.dynamic_rotate %8 by %c254_i32 dim 2 : vector<1x8x256xf32>, i32 -> vector<1x8x256xf32>
    %c3 = arith.constant 3 : index
    %c0_22 = arith.constant 0 : index
    %c0_23 = arith.constant 0 : index
    %44 = vector.load %arg4[%c3, %c0_22, %c0_23] : memref<4x8x1xf32, #tpu.memory_space<vmem>>, vector<1x8x1xf32>
    %45 = vector.shape_cast %44 : vector<1x8x1xf32> to vector<8x1xf32>
    %c3_24 = arith.constant 3 : index
    %c0_25 = arith.constant 0 : index
    %c0_26 = arith.constant 0 : index
    %46 = vector.load %arg6[%c3_24, %c0_25, %c0_26] : memref<4x1x256xf32, #tpu.memory_space<vmem>>, vector<1x1x256xf32>
    %47 = vector.shape_cast %46 : vector<1x1x256xf32> to vector<1x256xf32>
    %48 = vector.shape_cast %45 : vector<8x1xf32> to vector<1x8x1xf32>
    %49 = vector.shape_cast %47 : vector<1x256xf32> to vector<1x1x256xf32>
    %50 = vector.broadcast %49 : vector<1x1x256xf32> to vector<1x8x256xf32>
    %51 = arith.mulf %43, %50 : vector<1x8x256xf32>
    %52 = vector.broadcast %48 : vector<1x8x1xf32> to vector<1x8x256xf32>
    %53 = arith.mulf %51, %52 : vector<1x8x256xf32>
    %54 = arith.addf %42, %53 : vector<1x8x256xf32>
    %c16_i32 = arith.constant 16 : i32
    %55 = tpu.dynamic_rotate %54 by %c16_i32 dim 2 : vector<1x8x256xf32>, i32 -> vector<1x8x256xf32>
    %c0_27 = arith.constant 0 : index
    %c0_28 = arith.constant 0 : index
    %c0_29 = arith.constant 0 : index
    %56 = vector.load %arg5[%c0_27, %c0_28, %c0_29] : memref<4x8x1xf32, #tpu.memory_space<vmem>>, vector<1x8x1xf32>
    %57 = vector.shape_cast %56 : vector<1x8x1xf32> to vector<8x1xf32>
    %c0_30 = arith.constant 0 : index
    %c0_31 = arith.constant 0 : index
    %c0_32 = arith.constant 0 : index
    %58 = vector.load %arg7[%c0_30, %c0_31, %c0_32] : memref<4x1x256xf32, #tpu.memory_space<vmem>>, vector<1x1x256xf32>
    %59 = vector.shape_cast %58 : vector<1x1x256xf32> to vector<1x256xf32>
    %60 = vector.shape_cast %57 : vector<8x1xf32> to vector<1x8x1xf32>
    %61 = vector.shape_cast %59 : vector<1x256xf32> to vector<1x1x256xf32>
    %62 = vector.broadcast %61 : vector<1x1x256xf32> to vector<1x8x256xf32>
    %63 = arith.mulf %55, %62 : vector<1x8x256xf32>
    %64 = vector.broadcast %60 : vector<1x8x1xf32> to vector<1x8x256xf32>
    %65 = arith.mulf %63, %64 : vector<1x8x256xf32>
    %c1_33 = arith.constant 1 : index
    %c0_34 = arith.constant 0 : index
    %c0_35 = arith.constant 0 : index
    %66 = vector.load %arg5[%c1_33, %c0_34, %c0_35] : memref<4x8x1xf32, #tpu.memory_space<vmem>>, vector<1x8x1xf32>
    %67 = vector.shape_cast %66 : vector<1x8x1xf32> to vector<8x1xf32>
    %c1_36 = arith.constant 1 : index
    %c0_37 = arith.constant 0 : index
    %c0_38 = arith.constant 0 : index
    %68 = vector.load %arg7[%c1_36, %c0_37, %c0_38] : memref<4x1x256xf32, #tpu.memory_space<vmem>>, vector<1x1x256xf32>
    %69 = vector.shape_cast %68 : vector<1x1x256xf32> to vector<1x256xf32>
    %70 = vector.shape_cast %67 : vector<8x1xf32> to vector<1x8x1xf32>
    %71 = vector.shape_cast %69 : vector<1x256xf32> to vector<1x1x256xf32>
    %72 = vector.broadcast %71 : vector<1x1x256xf32> to vector<1x8x256xf32>
    %73 = arith.mulf %54, %72 : vector<1x8x256xf32>
    %74 = vector.broadcast %70 : vector<1x8x1xf32> to vector<1x8x256xf32>
    %75 = arith.mulf %73, %74 : vector<1x8x256xf32>
    %76 = arith.addf %65, %75 : vector<1x8x256xf32>
    %c240_i32 = arith.constant 240 : i32
    %77 = tpu.dynamic_rotate %54 by %c240_i32 dim 2 : vector<1x8x256xf32>, i32 -> vector<1x8x256xf32>
    %c2_39 = arith.constant 2 : index
    %c0_40 = arith.constant 0 : index
    %c0_41 = arith.constant 0 : index
    %78 = vector.load %arg5[%c2_39, %c0_40, %c0_41] : memref<4x8x1xf32, #tpu.memory_space<vmem>>, vector<1x8x1xf32>
    %79 = vector.shape_cast %78 : vector<1x8x1xf32> to vector<8x1xf32>
    %c2_42 = arith.constant 2 : index
    %c0_43 = arith.constant 0 : index
    %c0_44 = arith.constant 0 : index
    %80 = vector.load %arg7[%c2_42, %c0_43, %c0_44] : memref<4x1x256xf32, #tpu.memory_space<vmem>>, vector<1x1x256xf32>
    %81 = vector.shape_cast %80 : vector<1x1x256xf32> to vector<1x256xf32>
    %82 = vector.shape_cast %79 : vector<8x1xf32> to vector<1x8x1xf32>
    %83 = vector.shape_cast %81 : vector<1x256xf32> to vector<1x1x256xf32>
    %84 = vector.broadcast %83 : vector<1x1x256xf32> to vector<1x8x256xf32>
    %85 = arith.mulf %77, %84 : vector<1x8x256xf32>
    %86 = vector.broadcast %82 : vector<1x8x1xf32> to vector<1x8x256xf32>
    %87 = arith.mulf %85, %86 : vector<1x8x256xf32>
    %88 = arith.addf %76, %87 : vector<1x8x256xf32>
    %c224_i32 = arith.constant 224 : i32
    %89 = tpu.dynamic_rotate %54 by %c224_i32 dim 2 : vector<1x8x256xf32>, i32 -> vector<1x8x256xf32>
    %c3_45 = arith.constant 3 : index
    %c0_46 = arith.constant 0 : index
    %c0_47 = arith.constant 0 : index
    %90 = vector.load %arg5[%c3_45, %c0_46, %c0_47] : memref<4x8x1xf32, #tpu.memory_space<vmem>>, vector<1x8x1xf32>
    %91 = vector.shape_cast %90 : vector<1x8x1xf32> to vector<8x1xf32>
    %c3_48 = arith.constant 3 : index
    %c0_49 = arith.constant 0 : index
    %c0_50 = arith.constant 0 : index
    %92 = vector.load %arg7[%c3_48, %c0_49, %c0_50] : memref<4x1x256xf32, #tpu.memory_space<vmem>>, vector<1x1x256xf32>
    %93 = vector.shape_cast %92 : vector<1x1x256xf32> to vector<1x256xf32>
    %94 = vector.shape_cast %91 : vector<8x1xf32> to vector<1x8x1xf32>
    %95 = vector.shape_cast %93 : vector<1x256xf32> to vector<1x1x256xf32>
    %96 = vector.broadcast %95 : vector<1x1x256xf32> to vector<1x8x256xf32>
    %97 = arith.mulf %89, %96 : vector<1x8x256xf32>
    %98 = vector.broadcast %94 : vector<1x8x1xf32> to vector<1x8x256xf32>
    %99 = arith.mulf %97, %98 : vector<1x8x256xf32>
    %100 = arith.addf %88, %99 : vector<1x8x256xf32>
    %c0_51 = arith.constant 0 : index
    %c0_52 = arith.constant 0 : index
    %101 = vector.load %arg8[%c0_51, %c0_52] : memref<8x8xbf16, #tpu.memory_space<vmem>>, vector<8x8xbf16>
    %102 = arith.truncf %100 : vector<1x8x256xf32> to vector<1x8x256xbf16>
    %c0_53 = arith.constant 0 : index
    %c0_54 = arith.constant 0 : index
    %103 = vector.load %arg9[%c0_53, %c0_54] : memref<8x1xf32, #tpu.memory_space<vmem>>, vector<8x1xf32>
    %c0_55 = arith.constant 0 : index
    %c0_56 = arith.constant 0 : index
    %104 = vector.load %arg12[%c0_55, %c0_56] : memref<8x1xf32, #tpu.memory_space<vmem>>, vector<8x1xf32>
    %105 = vector.shape_cast %102 : vector<1x8x256xbf16> to vector<8x256xbf16>
    %cst = arith.constant dense<0.000000e+00> : vector<8x256xf32>
    %106 = tpu.matmul %101, %105, %cst {dimension_numbers = #tpu.dot_dimension_numbers<[1], [0], [0], [1], [0, 0, 1, 1], [], []>} : vector<8x8xbf16>, vector<8x256xbf16>, vector<8x256xf32> -> vector<8x256xf32>
    %107 = vector.broadcast %103 : vector<8x1xf32> to vector<8x256xf32>
    %108 = arith.addf %106, %107 : vector<8x256xf32>
    %cst_57 = arith.constant 0.000000e+00 : f32
    %109 = vector.broadcast %cst_57 : f32 to vector<8x256xf32>
    %110 = arith.maximumf %108, %109 : vector<8x256xf32>
    %c1_i32_58 = arith.constant 1 : i32
    %111 = tpu.dynamic_rotate %110 by %c1_i32_58 dim 1 : vector<8x256xf32>, i32 -> vector<8x256xf32>
    %c0_59 = arith.constant 0 : index
    %c0_60 = arith.constant 0 : index
    %c0_61 = arith.constant 0 : index
    %112 = vector.load %arg10[%c0_59, %c0_60, %c0_61] : memref<4x8x1xf32, #tpu.memory_space<vmem>>, vector<1x8x1xf32>
    %113 = vector.shape_cast %112 : vector<1x8x1xf32> to vector<8x1xf32>
    %c0_62 = arith.constant 0 : index
    %c0_63 = arith.constant 0 : index
    %c0_64 = arith.constant 0 : index
    %114 = vector.load %arg6[%c0_62, %c0_63, %c0_64] : memref<4x1x256xf32, #tpu.memory_space<vmem>>, vector<1x1x256xf32>
    %115 = vector.shape_cast %114 : vector<1x1x256xf32> to vector<1x256xf32>
    %116 = vector.broadcast %115 : vector<1x256xf32> to vector<8x256xf32>
    %117 = arith.mulf %111, %116 : vector<8x256xf32>
    %118 = vector.broadcast %113 : vector<8x1xf32> to vector<8x256xf32>
    %119 = arith.mulf %117, %118 : vector<8x256xf32>
    %c1_65 = arith.constant 1 : index
    %c0_66 = arith.constant 0 : index
    %c0_67 = arith.constant 0 : index
    %120 = vector.load %arg10[%c1_65, %c0_66, %c0_67] : memref<4x8x1xf32, #tpu.memory_space<vmem>>, vector<1x8x1xf32>
    %121 = vector.shape_cast %120 : vector<1x8x1xf32> to vector<8x1xf32>
    %c1_68 = arith.constant 1 : index
    %c0_69 = arith.constant 0 : index
    %c0_70 = arith.constant 0 : index
    %122 = vector.load %arg6[%c1_68, %c0_69, %c0_70] : memref<4x1x256xf32, #tpu.memory_space<vmem>>, vector<1x1x256xf32>
    %123 = vector.shape_cast %122 : vector<1x1x256xf32> to vector<1x256xf32>
    %124 = vector.broadcast %123 : vector<1x256xf32> to vector<8x256xf32>
    %125 = arith.mulf %110, %124 : vector<8x256xf32>
    %126 = vector.broadcast %121 : vector<8x1xf32> to vector<8x256xf32>
    %127 = arith.mulf %125, %126 : vector<8x256xf32>
    %128 = arith.addf %119, %127 : vector<8x256xf32>
    %c255_i32_71 = arith.constant 255 : i32
    %129 = tpu.dynamic_rotate %110 by %c255_i32_71 dim 1 : vector<8x256xf32>, i32 -> vector<8x256xf32>
    %c2_72 = arith.constant 2 : index
    %c0_73 = arith.constant 0 : index
    %c0_74 = arith.constant 0 : index
    %130 = vector.load %arg10[%c2_72, %c0_73, %c0_74] : memref<4x8x1xf32, #tpu.memory_space<vmem>>, vector<1x8x1xf32>
    %131 = vector.shape_cast %130 : vector<1x8x1xf32> to vector<8x1xf32>
    %c2_75 = arith.constant 2 : index
    %c0_76 = arith.constant 0 : index
    %c0_77 = arith.constant 0 : index
    %132 = vector.load %arg6[%c2_75, %c0_76, %c0_77] : memref<4x1x256xf32, #tpu.memory_space<vmem>>, vector<1x1x256xf32>
    %133 = vector.shape_cast %132 : vector<1x1x256xf32> to vector<1x256xf32>
    %134 = vector.broadcast %133 : vector<1x256xf32> to vector<8x256xf32>
    %135 = arith.mulf %129, %134 : vector<8x256xf32>
    %136 = vector.broadcast %131 : vector<8x1xf32> to vector<8x256xf32>
    %137 = arith.mulf %135, %136 : vector<8x256xf32>
    %138 = arith.addf %128, %137 : vector<8x256xf32>
    %c254_i32_78 = arith.constant 254 : i32
    %139 = tpu.dynamic_rotate %110 by %c254_i32_78 dim 1 : vector<8x256xf32>, i32 -> vector<8x256xf32>
    %c3_79 = arith.constant 3 : index
    %c0_80 = arith.constant 0 : index
    %c0_81 = arith.constant 0 : index
    %140 = vector.load %arg10[%c3_79, %c0_80, %c0_81] : memref<4x8x1xf32, #tpu.memory_space<vmem>>, vector<1x8x1xf32>
    %141 = vector.shape_cast %140 : vector<1x8x1xf32> to vector<8x1xf32>
    %c3_82 = arith.constant 3 : index
    %c0_83 = arith.constant 0 : index
    %c0_84 = arith.constant 0 : index
    %142 = vector.load %arg6[%c3_82, %c0_83, %c0_84] : memref<4x1x256xf32, #tpu.memory_space<vmem>>, vector<1x1x256xf32>
    %143 = vector.shape_cast %142 : vector<1x1x256xf32> to vector<1x256xf32>
    %144 = vector.broadcast %143 : vector<1x256xf32> to vector<8x256xf32>
    %145 = arith.mulf %139, %144 : vector<8x256xf32>
    %146 = vector.broadcast %141 : vector<8x1xf32> to vector<8x256xf32>
    %147 = arith.mulf %145, %146 : vector<8x256xf32>
    %148 = arith.addf %138, %147 : vector<8x256xf32>
    %c16_i32_85 = arith.constant 16 : i32
    %149 = tpu.dynamic_rotate %148 by %c16_i32_85 dim 1 : vector<8x256xf32>, i32 -> vector<8x256xf32>
    %c0_86 = arith.constant 0 : index
    %c0_87 = arith.constant 0 : index
    %c0_88 = arith.constant 0 : index
    %150 = vector.load %arg11[%c0_86, %c0_87, %c0_88] : memref<4x8x1xf32, #tpu.memory_space<vmem>>, vector<1x8x1xf32>
    %151 = vector.shape_cast %150 : vector<1x8x1xf32> to vector<8x1xf32>
    %c0_89 = arith.constant 0 : index
    %c0_90 = arith.constant 0 : index
    %c0_91 = arith.constant 0 : index
    %152 = vector.load %arg7[%c0_89, %c0_90, %c0_91] : memref<4x1x256xf32, #tpu.memory_space<vmem>>, vector<1x1x256xf32>
    %153 = vector.shape_cast %152 : vector<1x1x256xf32> to vector<1x256xf32>
    %154 = vector.broadcast %153 : vector<1x256xf32> to vector<8x256xf32>
    %155 = arith.mulf %149, %154 : vector<8x256xf32>
    %156 = vector.broadcast %151 : vector<8x1xf32> to vector<8x256xf32>
    %157 = arith.mulf %155, %156 : vector<8x256xf32>
    %c1_92 = arith.constant 1 : index
    %c0_93 = arith.constant 0 : index
    %c0_94 = arith.constant 0 : index
    %158 = vector.load %arg11[%c1_92, %c0_93, %c0_94] : memref<4x8x1xf32, #tpu.memory_space<vmem>>, vector<1x8x1xf32>
    %159 = vector.shape_cast %158 : vector<1x8x1xf32> to vector<8x1xf32>
    %c1_95 = arith.constant 1 : index
    %c0_96 = arith.constant 0 : index
    %c0_97 = arith.constant 0 : index
    %160 = vector.load %arg7[%c1_95, %c0_96, %c0_97] : memref<4x1x256xf32, #tpu.memory_space<vmem>>, vector<1x1x256xf32>
    %161 = vector.shape_cast %160 : vector<1x1x256xf32> to vector<1x256xf32>
    %162 = vector.broadcast %161 : vector<1x256xf32> to vector<8x256xf32>
    %163 = arith.mulf %148, %162 : vector<8x256xf32>
    %164 = vector.broadcast %159 : vector<8x1xf32> to vector<8x256xf32>
    %165 = arith.mulf %163, %164 : vector<8x256xf32>
    %166 = arith.addf %157, %165 : vector<8x256xf32>
    %c240_i32_98 = arith.constant 240 : i32
    %167 = tpu.dynamic_rotate %148 by %c240_i32_98 dim 1 : vector<8x256xf32>, i32 -> vector<8x256xf32>
    %c2_99 = arith.constant 2 : index
    %c0_100 = arith.constant 0 : index
    %c0_101 = arith.constant 0 : index
    %168 = vector.load %arg11[%c2_99, %c0_100, %c0_101] : memref<4x8x1xf32, #tpu.memory_space<vmem>>, vector<1x8x1xf32>
    %169 = vector.shape_cast %168 : vector<1x8x1xf32> to vector<8x1xf32>
    %c2_102 = arith.constant 2 : index
    %c0_103 = arith.constant 0 : index
    %c0_104 = arith.constant 0 : index
    %170 = vector.load %arg7[%c2_102, %c0_103, %c0_104] : memref<4x1x256xf32, #tpu.memory_space<vmem>>, vector<1x1x256xf32>
    %171 = vector.shape_cast %170 : vector<1x1x256xf32> to vector<1x256xf32>
    %172 = vector.broadcast %171 : vector<1x256xf32> to vector<8x256xf32>
    %173 = arith.mulf %167, %172 : vector<8x256xf32>
    %174 = vector.broadcast %169 : vector<8x1xf32> to vector<8x256xf32>
    %175 = arith.mulf %173, %174 : vector<8x256xf32>
    %176 = arith.addf %166, %175 : vector<8x256xf32>
    %c224_i32_105 = arith.constant 224 : i32
    %177 = tpu.dynamic_rotate %148 by %c224_i32_105 dim 1 : vector<8x256xf32>, i32 -> vector<8x256xf32>
    %c3_106 = arith.constant 3 : index
    %c0_107 = arith.constant 0 : index
    %c0_108 = arith.constant 0 : index
    %178 = vector.load %arg11[%c3_106, %c0_107, %c0_108] : memref<4x8x1xf32, #tpu.memory_space<vmem>>, vector<1x8x1xf32>
    %179 = vector.shape_cast %178 : vector<1x8x1xf32> to vector<8x1xf32>
    %c3_109 = arith.constant 3 : index
    %c0_110 = arith.constant 0 : index
    %c0_111 = arith.constant 0 : index
    %180 = vector.load %arg7[%c3_109, %c0_110, %c0_111] : memref<4x1x256xf32, #tpu.memory_space<vmem>>, vector<1x1x256xf32>
    %181 = vector.shape_cast %180 : vector<1x1x256xf32> to vector<1x256xf32>
    %182 = vector.broadcast %181 : vector<1x256xf32> to vector<8x256xf32>
    %183 = arith.mulf %177, %182 : vector<8x256xf32>
    %184 = vector.broadcast %179 : vector<8x1xf32> to vector<8x256xf32>
    %185 = arith.mulf %183, %184 : vector<8x256xf32>
    %186 = arith.addf %176, %185 : vector<8x256xf32>
    %187 = vector.broadcast %104 : vector<8x1xf32> to vector<8x256xf32>
    %188 = arith.addf %186, %187 : vector<8x256xf32>
    %c0_112 = arith.constant 0 : index
    %c0_113 = arith.constant 0 : index
    %c0_114 = arith.constant 0 : index
    %189 = vector.load %arg13[%c0_112, %c0_113, %c0_114] : memref<1x8x256xf32, #tpu.memory_space<vmem>>, vector<1x8x256xf32>
    %190 = vector.shape_cast %189 : vector<1x8x256xf32> to vector<8x256xf32>
    %191 = vector.shape_cast %188 : vector<8x256xf32> to vector<1x8x256xf32>
    tpu.vector_store %arg13[%c0_112, %c0_113, %c0_114], %191 {strides = array<i32>} : memref<1x8x256xf32, #tpu.memory_space<vmem>>, vector<1x8x256xf32>,
    return
  }
  func.func @transform_0(%arg0: i32) -> (i32, i32, i32) {
    %c0_i32 = arith.constant 0 : i32
    %c0_i32_0 = arith.constant 0 : i32
    %c0_i32_1 = arith.constant 0 : i32
    return %arg0, %c0_i32, %c0_i32_0 : i32, i32, i32
  }
  func.func @transform_1(%arg0: i32) -> (i32, i32) {
    %c0_i32 = arith.constant 0 : i32
    %c0_i32_0 = arith.constant 0 : i32
    %c0_i32_1 = arith.constant 0 : i32
    return %c0_i32, %c0_i32_0 : i32, i32
  }
  func.func @transform_2(%arg0: i32) -> (i32, i32) {
    %c0_i32 = arith.constant 0 : i32
    %c0_i32_0 = arith.constant 0 : i32
    %c0_i32_1 = arith.constant 0 : i32
    return %c0_i32, %c0_i32_0 : i32, i32
  }
  func.func @transform_3(%arg0: i32) -> (i32, i32, i32) {
    %c0_i32 = arith.constant 0 : i32
    %c0_i32_0 = arith.constant 0 : i32
    %c0_i32_1 = arith.constant 0 : i32
    %c0_i32_2 = arith.constant 0 : i32
    return %c0_i32, %c0_i32_0, %c0_i32_1 : i32, i32, i32
  }
  func.func @transform_4(%arg0: i32) -> (i32, i32, i32) {
    %c0_i32 = arith.constant 0 : i32
    %c0_i32_0 = arith.constant 0 : i32
    %c0_i32_1 = arith.constant 0 : i32
    %c0_i32_2 = arith.constant 0 : i32
    return %c0_i32, %c0_i32_0, %c0_i32_1 : i32, i32, i32
  }
  func.func @transform_5(%arg0: i32) -> (i32, i32, i32) {
    %c0_i32 = arith.constant 0 : i32
    %c0_i32_0 = arith.constant 0 : i32
    %c0_i32_1 = arith.constant 0 : i32
    %c0_i32_2 = arith.constant 0 : i32
    return %c0_i32, %c0_i32_0, %c0_i32_1 : i32, i32, i32
  }
  func.func @transform_6(%arg0: i32) -> (i32, i32, i32) {
    %c0_i32 = arith.constant 0 : i32
    %c0_i32_0 = arith.constant 0 : i32
    %c0_i32_1 = arith.constant 0 : i32
    %c0_i32_2 = arith.constant 0 : i32
    return %c0_i32, %c0_i32_0, %c0_i32_1 : i32, i32, i32
  }
  func.func @transform_7(%arg0: i32) -> (i32, i32) {
    %c0_i32 = arith.constant 0 : i32
    %c0_i32_0 = arith.constant 0 : i32
    %c0_i32_1 = arith.constant 0 : i32
    return %c0_i32, %c0_i32_0 : i32, i32
  }
  func.func @transform_8(%arg0: i32) -> (i32, i32) {
    %c0_i32 = arith.constant 0 : i32
    %c0_i32_0 = arith.constant 0 : i32
    %c0_i32_1 = arith.constant 0 : i32
    return %c0_i32, %c0_i32_0 : i32, i32
  }
  func.func @transform_9(%arg0: i32) -> (i32, i32, i32) {
    %c0_i32 = arith.constant 0 : i32
    %c0_i32_0 = arith.constant 0 : i32
    %c0_i32_1 = arith.constant 0 : i32
    %c0_i32_2 = arith.constant 0 : i32
    return %c0_i32, %c0_i32_0, %c0_i32_1 : i32, i32, i32
  }
  func.func @transform_10(%arg0: i32) -> (i32, i32, i32) {
    %c0_i32 = arith.constant 0 : i32
    %c0_i32_0 = arith.constant 0 : i32
    %c0_i32_1 = arith.constant 0 : i32
    %c0_i32_2 = arith.constant 0 : i32
    return %c0_i32, %c0_i32_0, %c0_i32_1 : i32, i32, i32
  }
  func.func @transform_11(%arg0: i32) -> (i32, i32) {
    %c0_i32 = arith.constant 0 : i32
    %c0_i32_0 = arith.constant 0 : i32
    %c0_i32_1 = arith.constant 0 : i32
    return %c0_i32, %c0_i32_0 : i32, i32
  }
  func.func @transform_12(%arg0: i32) -> (i32, i32, i32) {
    %c0_i32 = arith.constant 0 : i32
    %c0_i32_0 = arith.constant 0 : i32
    %c0_i32_1 = arith.constant 0 : i32
    return %arg0, %c0_i32, %c0_i32_0 : i32, i32, i32
  }
}

</mosaic_0001>

<llo_original>
// kernel: tpu_custom_call.1
$region0: #{tpu_custom_call.1}
  #allocation0 [shape = 'u32[]', space=smem, size = 0x4, offset = 0x4, fixed_abs, tag = 'smem constant byte address 0x4 - core index']
  #allocation1 [shape = 'u32[144,128]{1,0:T(1,128)}', space=vmem, size = 0x12000, scoped, tag = 'internal scratch']
  %s0 = inlined_call_operand.vmem [shape: f32[2,8,256], index: 0, kind: input, shape index: {}]
  %s1 = inlined_call_operand.vmem [shape: f32[8,1], index: 1, kind: input, shape index: {}]
  %s2 = inlined_call_operand.vmem [shape: f32[8,1], index: 2, kind: input, shape index: {}]
  %s3 = inlined_call_operand.vmem [shape: f32[4,8,1], index: 3, kind: input, shape index: {}]
  %s4 = inlined_call_operand.vmem [shape: f32[4,8,1], index: 4, kind: input, shape index: {}]
  %s5 = inlined_call_operand.vmem [shape: f32[4,1,256], index: 5, kind: input, shape index: {}]
  %s6 = inlined_call_operand.vmem [shape: f32[4,1,256], index: 6, kind: input, shape index: {}]
  %s7 = inlined_call_operand.vmem [shape: bf16[8,8], index: 7, kind: input, shape index: {}]
  %s8 = inlined_call_operand.vmem [shape: f32[8,1], index: 8, kind: input, shape index: {}]
  %s9 = inlined_call_operand.vmem [shape: f32[4,8,1], index: 9, kind: input, shape index: {}]
  %s10 = inlined_call_operand.vmem [shape: f32[4,8,1], index: 10, kind: input, shape index: {}]
  %s11 = inlined_call_operand.vmem [shape: f32[8,1], index: 11, kind: input, shape index: {}]
  %s12 = inlined_call_operand.hbm [shape: f32[2,8,256], index: 12, kind: output, shape index: {}]
  %s13 = sld [smem:[#allocation0]]
  $region81: #{tpu_custom_call.1} parent=0
    _
  %s15 = ssub.s32 1, %s13
  %s16 = scalar_select 0, %s15, %s13
  $region1: #{tpu_custom_call.1} parent=0
    #allocation2 [shape = 'u8[16384]{0}', space=vmem, size = 0x4000, scoped, tag = 'output window, operand 0']
    #allocation3 [shape = 's32[2]{0}', space=sflag, size = 0x8, scoped, tag = 'scoped memory for tpu_custom_call.1']
    %17 = vsyncpa [#allocation3], 0
    %s18 = scalar_lea.sflag [#allocation3], 1
    %19 = vsyncpa %s18, 0
    loop: start=0, step=1, limit=4
    $region2: #{tpu_custom_call.1} parent=1 // loop_pre_header
      _
    $region3: #{tpu_custom_call.1} parent=1 // loop_header
      %s21 = sphi 0, %s25
      %p22 = scmp.ge.s32.totalorder %s21, 4
      %s31 = sphi 0, %s33
      %s34 = sphi 0, %s31
      %s35 = sphi 0, %s34
      %s51 = sphi 0, %s35
      %s55 = sphi 0, %s55
      %s57 = sphi 0, %s55
      %s58 = sphi 0, %s57
      %s72 = sphi 0, %s58
      %s76 = sphi 0, %s76
      %s78 = sphi 0, %s76
      %s79 = sphi 0, %s78
      %s93 = sphi 0, %s79
      %s97 = sphi 0, %s97
      %s99 = sphi 0, %s97
      %s100 = sphi 0, %s99
      %s114 = sphi 0, %s100
      %s118 = sphi 0, %s118
      %s120 = sphi 0, %s118
      %s121 = sphi 0, %s120
      %s135 = sphi 0, %s121
      %s139 = sphi 0, %s139
      %s141 = sphi 0, %s139
      %s142 = sphi 0, %s141
      %s156 = sphi 0, %s142
      %s160 = sphi 0, %s160
      %s162 = sphi 0, %s160
      %s163 = sphi 0, %s162
      %s177 = sphi 0, %s163
      %s181 = sphi 0, %s181
      %s183 = sphi 0, %s181
      %s184 = sphi 0, %s183
      %s198 = sphi 0, %s184
      %s202 = sphi 0, %s202
      %s204 = sphi 0, %s202
      %s205 = sphi 0, %s204
      %s219 = sphi 0, %s205
      %s223 = sphi 0, %s223
      %s225 = sphi 0, %s223
      %s226 = sphi 0, %s225
      %s240 = sphi 0, %s226
      %s244 = sphi 0, %s244
      %s246 = sphi 0, %s244
      %s247 = sphi 0, %s246
      %s261 = sphi 0, %s247
      %s265 = sphi 0, %s265
      %s267 = sphi 0, %s265
      %s268 = sphi 0, %s267
      %s282 = sphi 0, %s268
      %s288 = sphi 0, %s290
      %s291 = sphi 0, %s288
      %s292 = sphi 0, %s291
      %s308 = sphi 0, %s292
    $region4: #{tpu_custom_call.1} parent=1 // loop_header_branch
      %24 = sbr.rel (%p22) target = $region8
    $region5: #{tpu_custom_call.1} parent=1 // loop_body
      %s26 = ssub.s32 %s21, 1
      %s27 = ssub.s32 %s21, 2
      %s28 = sadd.s32 %s21, 1
      %s29 = ssub.s32 %s21, %s28
      %p30 = scmp.eq.s32.totalorder %s29, 0
      %s32 = sadd.s32 %s31, 1
      %s33 = scalar_select %p30, %s31, %s32
      %p36 = pneg %p30
      %p37 = scmp.eq.s32.totalorder %s21, 1
      %p38 = por %p36, %p37
      %p39 = scmp.ne.s32.totalorder %s31, %s34
      %p40 = scmp.eq.s32.totalorder %s21, 0
      %p41 = por %p39, %p40
      %p42 = scmp.ne.s32.totalorder %s31, %s34
      %p43 = scmp.eq.s32.totalorder %s26, 1
      %p44 = por %p42, %p43
      %p45 = scmp.ne.s32.totalorder %s34, %s35
      %p46 = scmp.eq.s32.totalorder %s26, 0
      %p47 = por %p45, %p46
      %p48 = scmp.ne.s32.totalorder %s34, %s35
      %p49 = scmp.eq.s32.totalorder %s27, 1
      %p50 = por %p48, %p49
      %p52 = scmp.ne.s32.totalorder %s35, %s51
      %p53 = scmp.eq.s32.totalorder %s27, 0
      %p54 = por %p52, %p53
      %s56 = sadd.s32 %s55, 1
      %p59 = scmp.eq.s32.totalorder %s21, 1
      %p60 = scmp.ne.s32.totalorder %s55, %s57
      %p61 = scmp.eq.s32.totalorder %s21, 0
      %p62 = por %p60, %p61
      %p63 = scmp.ne.s32.totalorder %s55, %s57
      %p64 = scmp.eq.s32.totalorder %s26, 1
      %p65 = por %p63, %p64
      %p66 = scmp.ne.s32.totalorder %s57, %s58
      %p67 = scmp.eq.s32.totalorder %s26, 0
      %p68 = por %p66, %p67
      %p69 = scmp.ne.s32.totalorder %s57, %s58
      %p70 = scmp.eq.s32.totalorder %s27, 1
      %p71 = por %p69, %p70
      %p73 = scmp.ne.s32.totalorder %s58, %s72
      %p74 = scmp.eq.s32.totalorder %s27, 0
      %p75 = por %p73, %p74
      %s77 = sadd.s32 %s76, 1
      %p80 = scmp.eq.s32.totalorder %s21, 1
      %p81 = scmp.ne.s32.totalorder %s76, %s78
      %p82 = scmp.eq.s32.totalorder %s21, 0
      %p83 = por %p81, %p82
      %p84 = scmp.ne.s32.totalorder %s76, %s78
      %p85 = scmp.eq.s32.totalorder %s26, 1
      %p86 = por %p84, %p85
      %p87 = scmp.ne.s32.totalorder %s78, %s79
      %p88 = scmp.eq.s32.totalorder %s26, 0
      %p89 = por %p87, %p88
      %p90 = scmp.ne.s32.totalorder %s78, %s79
      %p91 = scmp.eq.s32.totalorder %s27, 1
      %p92 = por %p90, %p91
      %p94 = scmp.ne.s32.totalorder %s79, %s93
      %p95 = scmp.eq.s32.totalorder %s27, 0
      %p96 = por %p94, %p95
      %s98 = sadd.s32 %s97, 1
      %p101 = scmp.eq.s32.totalorder %s21, 1
      %p102 = scmp.ne.s32.totalorder %s97, %s99
      %p103 = scmp.eq.s32.totalorder %s21, 0
      %p104 = por %p102, %p103
      %p105 = scmp.ne.s32.totalorder %s97, %s99
      %p106 = scmp.eq.s32.totalorder %s26, 1
      %p107 = por %p105, %p106
      %p108 = scmp.ne.s32.totalorder %s99, %s100
      %p109 = scmp.eq.s32.totalorder %s26, 0
      %p110 = por %p108, %p109
      %p111 = scmp.ne.s32.totalorder %s99, %s100
      %p112 = scmp.eq.s32.totalorder %s27, 1
      %p113 = por %p111, %p112
      %p115 = scmp.ne.s32.totalorder %s100, %s114
      %p116 = scmp.eq.s32.totalorder %s27, 0
      %p117 = por %p115, %p116
      %s119 = sadd.s32 %s118, 1
      %p122 = scmp.eq.s32.totalorder %s21, 1
      %p123 = scmp.ne.s32.totalorder %s118, %s120
      %p124 = scmp.eq.s32.totalorder %s21, 0
      %p125 = por %p123, %p124
      %p126 = scmp.ne.s32.totalorder %s118, %s120
      %p127 = scmp.eq.s32.totalorder %s26, 1
      %p128 = por %p126, %p127
      %p129 = scmp.ne.s32.totalorder %s120, %s121
      %p130 = scmp.eq.s32.totalorder %s26, 0
      %p131 = por %p129, %p130
      %p132 = scmp.ne.s32.totalorder %s120, %s121
      %p133 = scmp.eq.s32.totalorder %s27, 1
      %p134 = por %p132, %p133
      %p136 = scmp.ne.s32.totalorder %s121, %s135
      %p137 = scmp.eq.s32.totalorder %s27, 0
      %p138 = por %p136, %p137
      %s140 = sadd.s32 %s139, 1
      %p143 = scmp.eq.s32.totalorder %s21, 1
      %p144 = scmp.ne.s32.totalorder %s139, %s141
      %p145 = scmp.eq.s32.totalorder %s21, 0
      %p146 = por %p144, %p145
      %p147 = scmp.ne.s32.totalorder %s139, %s141
      %p148 = scmp.eq.s32.totalorder %s26, 1
      %p149 = por %p147, %p148
      %p150 = scmp.ne.s32.totalorder %s141, %s142
      %p151 = scmp.eq.s32.totalorder %s26, 0
      %p152 = por %p150, %p151
      %p153 = scmp.ne.s32.totalorder %s141, %s142
      %p154 = scmp.eq.s32.totalorder %s27, 1
      %p155 = por %p153, %p154
      %p157 = scmp.ne.s32.totalorder %s142, %s156
      %p158 = scmp.eq.s32.totalorder %s27, 0
      %p159 = por %p157, %p158
      %s161 = sadd.s32 %s160, 1
      %p164 = scmp.eq.s32.totalorder %s21, 1
      %p165 = scmp.ne.s32.totalorder %s160, %s162
      %p166 = scmp.eq.s32.totalorder %s21, 0
      %p167 = por %p165, %p166
      %p168 = scmp.ne.s32.totalorder %s160, %s162
      %p169 = scmp.eq.s32.totalorder %s26, 1
      %p170 = por %p168, %p169
      %p171 = scmp.ne.s32.totalorder %s162, %s163
      %p172 = scmp.eq.s32.totalorder %s26, 0
      %p173 = por %p171, %p172
      %p174 = scmp.ne.s32.totalorder %s162, %s163
      %p175 = scmp.eq.s32.totalorder %s27, 1
      %p176 = por %p174, %p175
      %p178 = scmp.ne.s32.totalorder %s163, %s177
      %p179 = scmp.eq.s32.totalorder %s27, 0
      %p180 = por %p178, %p179
      %s182 = sadd.s32 %s181, 1
      %p185 = scmp.eq.s32.totalorder %s21, 1
      %p186 = scmp.ne.s32.totalorder %s181, %s183
      %p187 = scmp.eq.s32.totalorder %s21, 0
      %p188 = por %p186, %p187
      %p189 = scmp.ne.s32.totalorder %s181, %s183
      %p190 = scmp.eq.s32.totalorder %s26, 1
      %p191 = por %p189, %p190
      %p192 = scmp.ne.s32.totalorder %s183, %s184
      %p193 = scmp.eq.s32.totalorder %s26, 0
      %p194 = por %p192, %p193
      %p195 = scmp.ne.s32.totalorder %s183, %s184
      %p196 = scmp.eq.s32.totalorder %s27, 1
      %p197 = por %p195, %p196
      %p199 = scmp.ne.s32.totalorder %s184, %s198
      %p200 = scmp.eq.s32.totalorder %s27, 0
      %p201 = por %p199, %p200
      %s203 = sadd.s32 %s202, 1
      %p206 = scmp.eq.s32.totalorder %s21, 1
      %p207 = scmp.ne.s32.totalorder %s202, %s204
      %p208 = scmp.eq.s32.totalorder %s21, 0
      %p209 = por %p207, %p208
      %p210 = scmp.ne.s32.totalorder %s202, %s204
      %p211 = scmp.eq.s32.totalorder %s26, 1
      %p212 = por %p210, %p211
      %p213 = scmp.ne.s32.totalorder %s204, %s205
      %p214 = scmp.eq.s32.totalorder %s26, 0
      %p215 = por %p213, %p214
      %p216 = scmp.ne.s32.totalorder %s204, %s205
      %p217 = scmp.eq.s32.totalorder %s27, 1
      %p218 = por %p216, %p217
      %p220 = scmp.ne.s32.totalorder %s205, %s219
      %p221 = scmp.eq.s32.totalorder %s27, 0
      %p222 = por %p220, %p221
      %s224 = sadd.s32 %s223, 1
      %p227 = scmp.eq.s32.totalorder %s21, 1
      %p228 = scmp.ne.s32.totalorder %s223, %s225
      %p229 = scmp.eq.s32.totalorder %s21, 0
      %p230 = por %p228, %p229
      %p231 = scmp.ne.s32.totalorder %s223, %s225
      %p232 = scmp.eq.s32.totalorder %s26, 1
      %p233 = por %p231, %p232
      %p234 = scmp.ne.s32.totalorder %s225, %s226
      %p235 = scmp.eq.s32.totalorder %s26, 0
      %p236 = por %p234, %p235
      %p237 = scmp.ne.s32.totalorder %s225, %s226
      %p238 = scmp.eq.s32.totalorder %s27, 1
      %p239 = por %p237, %p238
      %p241 = scmp.ne.s32.totalorder %s226, %s240
      %p242 = scmp.eq.s32.totalorder %s27, 0
      %p243 = por %p241, %p242
      %s245 = sadd.s32 %s244, 1
      %p248 = scmp.eq.s32.totalorder %s21, 1
      %p249 = scmp.ne.s32.totalorder %s244, %s246
      %p250 = scmp.eq.s32.totalorder %s21, 0
      %p251 = por %p249, %p250
      %p252 = scmp.ne.s32.totalorder %s244, %s246
      %p253 = scmp.eq.s32.totalorder %s26, 1
      %p254 = por %p252, %p253
      %p255 = scmp.ne.s32.totalorder %s246, %s247
      %p256 = scmp.eq.s32.totalorder %s26, 0
      %p257 = por %p255, %p256
      %p258 = scmp.ne.s32.totalorder %s246, %s247
      %p259 = scmp.eq.s32.totalorder %s27, 1
      %p260 = por %p258, %p259
      %p262 = scmp.ne.s32.totalorder %s247, %s261
      %p263 = scmp.eq.s32.totalorder %s27, 0
      %p264 = por %p262, %p263
      %s266 = sadd.s32 %s265, 1
      %p269 = scmp.eq.s32.totalorder %s21, 1
      %p270 = scmp.ne.s32.totalorder %s265, %s267
      %p271 = scmp.eq.s32.totalorder %s21, 0
      %p272 = por %p270, %p271
      %p273 = scmp.ne.s32.totalorder %s265, %s267
      %p274 = scmp.eq.s32.totalorder %s26, 1
      %p275 = por %p273, %p274
      %p276 = scmp.ne.s32.totalorder %s267, %s268
      %p277 = scmp.eq.s32.totalorder %s26, 0
      %p278 = por %p276, %p277
      %p279 = scmp.ne.s32.totalorder %s267, %s268
      %p280 = scmp.eq.s32.totalorder %s27, 1
      %p281 = por %p279, %p280
      %p283 = scmp.ne.s32.totalorder %s268, %s282
      %p284 = scmp.eq.s32.totalorder %s27, 0
      %p285 = por %p283, %p284
      %s286 = ssub.s32 %s21, %s28
      %p287 = scmp.eq.s32.totalorder %s286, 0
      %s289 = sadd.s32 %s288, 1
      %s290 = scalar_select %p287, %s288, %s289
      %p293 = pneg %p287
      %p294 = scmp.eq.s32.totalorder %s21, 1
      %p295 = por %p293, %p294
      %p296 = scmp.ne.s32.totalorder %s288, %s291
      %p297 = scmp.eq.s32.totalorder %s21, 0
      %p298 = por %p296, %p297
      %p299 = scmp.ne.s32.totalorder %s288, %s291
      %p300 = scmp.eq.s32.totalorder %s26, 1
      %p301 = por %p299, %p300
      %p302 = scmp.ne.s32.totalorder %s291, %s292
      %p303 = scmp.eq.s32.totalorder %s26, 0
      %p304 = por %p302, %p303
      %p305 = scmp.ne.s32.totalorder %s291, %s292
      %p306 = scmp.eq.s32.totalorder %s27, 1
      %p307 = por %p305, %p306
      %p309 = scmp.ne.s32.totalorder %s292, %s308
      %p310 = scmp.eq.s32.totalorder %s27, 0
      %p311 = por %p309, %p310
      %p312 = scmp.le.s32.totalorder 1, %s21
      %p313 = scmp.lt.s32.totalorder %s21, 3
      %p314 = pnand %p312, %p313
      %p315 = pneg %p314
      // Predicated region
      $region9: #{tpu_custom_call.1} parent=5 // pred_check
        _
      $region10: #{tpu_custom_call.1} parent=5 // pred_check_branch
        %317 = sbr.rel (%p314) target = $region12
      $region11: #{tpu_custom_call.1} parent=5 // pred_region
        %s318 = ssub.s32 %s21, 1
        // Predicated region
        $region13: #{tpu_custom_call.1} parent=11 // pred_check
          %p319 = pneg %p68
        $region14: #{tpu_custom_call.1} parent=11 // pred_check_branch
          %321 = sbr.rel (%p319) target = $region16
        $region15: #{tpu_custom_call.1} parent=11 // pred_region
          _
        $region16: #{tpu_custom_call.1} parent=11 // pred_fallthru
          _
        // Predicated region
        $region17: #{tpu_custom_call.1} parent=11 // pred_check
          %p322 = pneg %p89
        $region18: #{tpu_custom_call.1} parent=11 // pred_check_branch
          %324 = sbr.rel (%p322) target = $region20
        $region19: #{tpu_custom_call.1} parent=11 // pred_region
          _
        $region20: #{tpu_custom_call.1} parent=11 // pred_fallthru
          _
        // Predicated region
        $region21: #{tpu_custom_call.1} parent=11 // pred_check
          %p325 = pneg %p110
        $region22: #{tpu_custom_call.1} parent=11 // pred_check_branch
          %327 = sbr.rel (%p325) target = $region24
        $region23: #{tpu_custom_call.1} parent=11 // pred_region
          _
        $region24: #{tpu_custom_call.1} parent=11 // pred_fallthru
          _
        // Predicated region
        $region25: #{tpu_custom_call.1} parent=11 // pred_check
          %p328 = pneg %p131
        $region26: #{tpu_custom_call.1} parent=11 // pred_check_branch
          %330 = sbr.rel (%p328) target = $region28
        $region27: #{tpu_custom_call.1} parent=11 // pred_region
          _
        $region28: #{tpu_custom_call.1} parent=11 // pred_fallthru
          _
        // Predicated region
        $region29: #{tpu_custom_call.1} parent=11 // pred_check
          %p331 = pneg %p152
        $region30: #{tpu_custom_call.1} parent=11 // pred_check_branch
          %333 = sbr.rel (%p331) target = $region32
        $region31: #{tpu_custom_call.1} parent=11 // pred_region
          _
        $region32: #{tpu_custom_call.1} parent=11 // pred_fallthru
          _
        // Predicated region
        $region33: #{tpu_custom_call.1} parent=11 // pred_check
          %p334 = pneg %p173
        $region34: #{tpu_custom_call.1} parent=11 // pred_check_branch
          %336 = sbr.rel (%p334) target = $region36
        $region35: #{tpu_custom_call.1} parent=11 // pred_region
          _
        $region36: #{tpu_custom_call.1} parent=11 // pred_fallthru
          _
        // Predicated region
        $region37: #{tpu_custom_call.1} parent=11 // pred_check
          %p337 = pneg %p194
        $region38: #{tpu_custom_call.1} parent=11 // pred_check_branch
          %339 = sbr.rel (%p337) target = $region40
        $region39: #{tpu_custom_call.1} parent=11 // pred_region
          _
        $region40: #{tpu_custom_call.1} parent=11 // pred_fallthru
          _
        // Predicated region
        $region41: #{tpu_custom_call.1} parent=11 // pred_check
          %p340 = pneg %p215
        $region42: #{tpu_custom_call.1} parent=11 // pred_check_branch
          %342 = sbr.rel (%p340) target = $region44
        $region43: #{tpu_custom_call.1} parent=11 // pred_region
          _
        $region44: #{tpu_custom_call.1} parent=11 // pred_fallthru
          _
        // Predicated region
        $region45: #{tpu_custom_call.1} parent=11 // pred_check
          %p343 = pneg %p236
        $region46: #{tpu_custom_call.1} parent=11 // pred_check_branch
          %345 = sbr.rel (%p343) target = $region48
        $region47: #{tpu_custom_call.1} parent=11 // pred_region
          _
        $region48: #{tpu_custom_call.1} parent=11 // pred_fallthru
          _
        // Predicated region
        $region49: #{tpu_custom_call.1} parent=11 // pred_check
          %p346 = pneg %p257
        $region50: #{tpu_custom_call.1} parent=11 // pred_check_branch
          %348 = sbr.rel (%p346) target = $region52
        $region51: #{tpu_custom_call.1} parent=11 // pred_region
          _
        $region52: #{tpu_custom_call.1} parent=11 // pred_fallthru
          _
        // Predicated region
        $region53: #{tpu_custom_call.1} parent=11 // pred_check
          %p349 = pneg %p278
        $region54: #{tpu_custom_call.1} parent=11 // pred_check_branch
          %351 = sbr.rel (%p349) target = $region56
        $region55: #{tpu_custom_call.1} parent=11 // pred_region
          _
        $region56: #{tpu_custom_call.1} parent=11 // pred_fallthru
          _
      $region12: #{tpu_custom_call.1} parent=5 // pred_fallthru
        _
      %p352 = scmp.lt.s32.totalorder %s21, 2
      // Predicated region
      $region57: #{tpu_custom_call.1} parent=5 // pred_check
        %p353 = pneg %p352
      $region58: #{tpu_custom_call.1} parent=5 // pred_check_branch
        %355 = sbr.rel (%p353) target = $region60
      $region59: #{tpu_custom_call.1} parent=5 // pred_region
        // Predicated region
        $region61: #{tpu_custom_call.1} parent=59 // pred_check
          %p356 = pneg %p41
        $region62: #{tpu_custom_call.1} parent=59 // pred_check_branch
          %358 = sbr.rel (%p356) target = $region64
        $region63: #{tpu_custom_call.1} parent=59 // pred_region
          %p359 = scmp.lt.s32.totalorder %s21, 1
          %s360 = scalar_select %p359, %s21, 1
          %s361 = smul.addr %s360, 2
          %s362 = smul.addr %s361, 8
          %s363 = scalar_lea.vmem %s0, %s362
        $region64: #{tpu_custom_call.1} parent=59 // pred_fallthru
          _
      $region60: #{tpu_custom_call.1} parent=5 // pred_fallthru
        _
      %p364 = scmp.le.s32.totalorder 1, %s21
      %p365 = scmp.lt.s32.totalorder %s21, 3
      %p366 = pnand %p364, %p365
      %p367 = pneg %p366
      // Predicated region
      $region65: #{tpu_custom_call.1} parent=5 // pred_check
        _
      $region66: #{tpu_custom_call.1} parent=5 // pred_check_branch
        %369 = sbr.rel (%p366) target = $region68
      $region67: #{tpu_custom_call.1} parent=5 // pred_region
        %s370 = ssub.s32 %s21, 1
        %p371 = scmp.lt.s32.totalorder %s26, 1
        %s372 = scalar_select %p371, %s26, 1
        %s373 = smul.addr %s372, 2
        %s374 = smul.addr %s373, 8
        %s375 = scalar_lea.vmem %s0, %s374
        %p376 = pneg %p47
        %p377 = pneg %p44
        %p378 = pneg %p68
        %p379 = pneg %p65
        %p380 = pneg %p89
        %p381 = pneg %p86
        %p382 = pneg %p110
        %p383 = pneg %p107
        %p384 = pneg %p131
        %p385 = pneg %p128
        %p386 = pneg %p152
        %p387 = pneg %p149
        %p388 = pneg %p173
        %p389 = pneg %p170
        %p390 = pneg %p194
        %p391 = pneg %p191
        %p392 = pneg %p215
        %p393 = pneg %p212
        %p394 = pneg %p236
        %p395 = pneg %p233
        %p396 = pneg %p257
        %p397 = pneg %p254
        %p398 = pneg %p278
        %p399 = pneg %p275
        %p400 = pneg %p304
        %p401 = pneg %p301
        %s402 = sand.u32 %s291, 1
        %s403 = scalar_lea.sflag [#allocation3], %s402
        %s404 = sand.u32 %s291, 1
        %s405 = smul.addr %s404, 16
        %s406 = scalar_lea.vmem [#allocation2], %s405
        %p407 = scmp.lt.s32.totalorder %s26, 1
        %s408 = scalar_select %p407, %s26, 1
        %s409 = smul.addr %s408, 2
        %s410 = smul.addr %s409, 8
        %s411 = scalar_lea.vmem %s0, %s410
        %v413 = vld [vmem:[%s411] sm:$0xff]
        %v414 = vld [vmem:[%s411 + $0x8] sm:$0xff]
        %v415 = vld [vmem:[%s1] sm:$0xff]
        %417 = vset.pattern.permute.xlu0 0
        %418 = vperm.xlu0 %417, %v415
        %v419 = vpop.permute.xlu0 %418
        %v421 = vmul.f32 %v413, %v419
        %v422 = vmul.f32 %v414, %v419
        %v423 = vld [vmem:[%s2] sm:$0xff]
        %425 = vset.pattern.permute.xlu0 0
        %426 = vperm.xlu0 %425, %v423
        %v427 = vpop.permute.xlu0 %426
        %v429 = vadd.f32 %v421, %v427
        %v430 = vadd.f32 %v422, %v427
        %431 = vrot.lane.b32.xlu0 %v429, 1
        %v432 = vpop.permute.xlu0 %431
        %433 = vrot.lane.b32.xlu0 %v430, 1
        %v434 = vpop.permute.xlu0 %433
        %v435 = vlaneseq
        %v436 = vand.u32 %v435, 127
        %vm437 = vcmp.lt.s32.totalorder %v436, 1
        %v438 = vsel %vm437, %v432, %v434
        %v439 = vsel %vm437, %v434, %v432
        %v440 = vld [vmem:[%s3] sm:$0xff]
        %v441 = vld [vmem:[%s5] sm:$0x3]
        %v443 = vlaneseq
        %v444 = vshrl.u32 %v443, 7
        %v445 = vsub.s32 0, %v444
        %v446 = vrot.slane %v441, %v445
        %v447 = vlaneseq
        %v448 = vshrl.u32 %v447, 7
        %v449 = vsub.s32 1, %v448
        %v450 = vrot.slane %v441, %v449
        %v453 = vmul.f32 %v439, %v446
        %v454 = vmul.f32 %v438, %v450
        %456 = vset.pattern.permute.xlu0 0
        %457 = vperm.xlu0 %456, %v440
        %v458 = vpop.permute.xlu0 %457
        %v460 = vmul.f32 %v453, %v458
        %v461 = vmul.f32 %v454, %v458
        %s462 = scalar_lea.vmem %s3, 8
        %v463 = vld [vmem:[%s462] sm:$0xff]
        %s464 = scalar_lea.vmem %s5, 2
        %v465 = vld [vmem:[%s464] sm:$0x3]
        %v467 = vlaneseq
        %v468 = vshrl.u32 %v467, 7
        %v469 = vsub.s32 0, %v468
        %v470 = vrot.slane %v465, %v469
        %v471 = vlaneseq
        %v472 = vshrl.u32 %v471, 7
        %v473 = vsub.s32 1, %v472
        %v474 = vrot.slane %v465, %v473
        %v477 = vmul.f32 %v429, %v470
        %v478 = vmul.f32 %v430, %v474
        %480 = vset.pattern.permute.xlu0 0
        %481 = vperm.xlu0 %480, %v463
        %v482 = vpop.permute.xlu0 %481
        %v484 = vmul.f32 %v477, %v482
        %v485 = vmul.f32 %v478, %v482
        %v486 = vadd.f32 %v460, %v484
        %v487 = vadd.f32 %v461, %v485
        %488 = vrot.lane.b32.xlu0 %v429, 127
        %v489 = vpop.permute.xlu0 %488
        %490 = vrot.lane.b32.xlu0 %v430, 127
        %v491 = vpop.permute.xlu0 %490
        %vm492 = vcmp.lt.s32.totalorder %v436, 127
        %v493 = vsel %vm492, %v489, %v491
        %v494 = vsel %vm492, %v491, %v489
        %s495 = scalar_lea.vmem %s3, 16
        %v496 = vld [vmem:[%s495] sm:$0xff]
        %s497 = scalar_lea.vmem %s5, 4
        %v498 = vld [vmem:[%s497] sm:$0x3]
        %v500 = vlaneseq
        %v501 = vshrl.u32 %v500, 7
        %v502 = vsub.s32 0, %v501
        %v503 = vrot.slane %v498, %v502
        %v504 = vlaneseq
        %v505 = vshrl.u32 %v504, 7
        %v506 = vsub.s32 1, %v505
        %v507 = vrot.slane %v498, %v506
        %v510 = vmul.f32 %v493, %v503
        %v511 = vmul.f32 %v494, %v507
        %513 = vset.pattern.permute.xlu0 0
        %514 = vperm.xlu0 %513, %v496
        %v515 = vpop.permute.xlu0 %514
        %v517 = vmul.f32 %v510, %v515
        %v518 = vmul.f32 %v511, %v515
        %v519 = vadd.f32 %v486, %v517
        %v520 = vadd.f32 %v487, %v518
        %521 = vrot.lane.b32.xlu0 %v429, 126
        %v522 = vpop.permute.xlu0 %521
        %523 = vrot.lane.b32.xlu0 %v430, 126
        %v524 = vpop.permute.xlu0 %523
        %vm525 = vcmp.lt.s32.totalorder %v436, 126
        %v526 = vsel %vm525, %v522, %v524
        %v527 = vsel %vm525, %v524, %v522
        %s528 = scalar_lea.vmem %s3, 24
        %v529 = vld [vmem:[%s528] sm:$0xff]
        %s530 = scalar_lea.vmem %s5, 6
        %v531 = vld [vmem:[%s530] sm:$0x3]
        %v533 = vlaneseq
        %v534 = vshrl.u32 %v533, 7
        %v535 = vsub.s32 0, %v534
        %v536 = vrot.slane %v531, %v535
        %v537 = vlaneseq
        %v538 = vshrl.u32 %v537, 7
        %v539 = vsub.s32 1, %v538
        %v540 = vrot.slane %v531, %v539
        %v543 = vmul.f32 %v526, %v536
        %v544 = vmul.f32 %v527, %v540
        %546 = vset.pattern.permute.xlu0 0
        %547 = vperm.xlu0 %546, %v529
        %v548 = vpop.permute.xlu0 %547
        %v550 = vmul.f32 %v543, %v548
        %v551 = vmul.f32 %v544, %v548
        %v552 = vadd.f32 %v519, %v550
        %v553 = vadd.f32 %v520, %v551
        %554 = vrot.lane.b32.xlu0 %v552, 16
        %v555 = vpop.permute.xlu0 %554
        %556 = vrot.lane.b32.xlu0 %v553, 16
        %v557 = vpop.permute.xlu0 %556
        %vm558 = vcmp.lt.s32.totalorder %v436, 16
        %v559 = vsel %vm558, %v555, %v557
        %v560 = vsel %vm558, %v557, %v555
        %v561 = vld [vmem:[%s4] sm:$0xff]
        %v562 = vld [vmem:[%s6] sm:$0x3]
        %v564 = vlaneseq
        %v565 = vshrl.u32 %v564, 7
        %v566 = vsub.s32 0, %v565
        %v567 = vrot.slane %v562, %v566
        %v568 = vlaneseq
        %v569 = vshrl.u32 %v568, 7
        %v570 = vsub.s32 1, %v569
        %v571 = vrot.slane %v562, %v570
        %v574 = vmul.f32 %v560, %v567
        %v575 = vmul.f32 %v559, %v571
        %577 = vset.pattern.permute.xlu0 0
        %578 = vperm.xlu0 %577, %v561
        %v579 = vpop.permute.xlu0 %578
        %v581 = vmul.f32 %v574, %v579
        %v582 = vmul.f32 %v575, %v579
        %s583 = scalar_lea.vmem %s4, 8
        %v584 = vld [vmem:[%s583] sm:$0xff]
        %s585 = scalar_lea.vmem %s6, 2
        %v586 = vld [vmem:[%s585] sm:$0x3]
        %v588 = vlaneseq
        %v589 = vshrl.u32 %v588, 7
        %v590 = vsub.s32 0, %v589
        %v591 = vrot.slane %v586, %v590
        %v592 = vlaneseq
        %v593 = vshrl.u32 %v592, 7
        %v594 = vsub.s32 1, %v593
        %v595 = vrot.slane %v586, %v594
        %v598 = vmul.f32 %v552, %v591
        %v599 = vmul.f32 %v553, %v595
        %601 = vset.pattern.permute.xlu0 0
        %602 = vperm.xlu0 %601, %v584
        %v603 = vpop.permute.xlu0 %602
        %v605 = vmul.f32 %v598, %v603
        %v606 = vmul.f32 %v599, %v603
        %v607 = vadd.f32 %v581, %v605
        %v608 = vadd.f32 %v582, %v606
        %609 = vrot.lane.b32.xlu0 %v552, 112
        %v610 = vpop.permute.xlu0 %609
        %611 = vrot.lane.b32.xlu0 %v553, 112
        %v612 = vpop.permute.xlu0 %611
        %vm613 = vcmp.lt.s32.totalorder %v436, 112
        %v614 = vsel %vm613, %v610, %v612
        %v615 = vsel %vm613, %v612, %v610
        %s616 = scalar_lea.vmem %s4, 16
        %v617 = vld [vmem:[%s616] sm:$0xff]
        %s618 = scalar_lea.vmem %s6, 4
        %v619 = vld [vmem:[%s618] sm:$0x3]
        %v621 = vlaneseq
        %v622 = vshrl.u32 %v621, 7
        %v623 = vsub.s32 0, %v622
        %v624 = vrot.slane %v619, %v623
        %v625 = vlaneseq
        %v626 = vshrl.u32 %v625, 7
        %v627 = vsub.s32 1, %v626
        %v628 = vrot.slane %v619, %v627
        %v631 = vmul.f32 %v614, %v624
        %v632 = vmul.f32 %v615, %v628
        %634 = vset.pattern.permute.xlu0 0
        %635 = vperm.xlu0 %634, %v617
        %v636 = vpop.permute.xlu0 %635
        %v638 = vmul.f32 %v631, %v636
        %v639 = vmul.f32 %v632, %v636
        %v640 = vadd.f32 %v607, %v638
        %v641 = vadd.f32 %v608, %v639
        %642 = vrot.lane.b32.xlu0 %v552, 96
        %v643 = vpop.permute.xlu0 %642
        %644 = vrot.lane.b32.xlu0 %v553, 96
        %v645 = vpop.permute.xlu0 %644
        %vm646 = vcmp.lt.s32.totalorder %v436, 96
        %v647 = vsel %vm646, %v643, %v645
        %v648 = vsel %vm646, %v645, %v643
        %s649 = scalar_lea.vmem %s4, 24
        %v650 = vld [vmem:[%s649] sm:$0xff]
        %s651 = scalar_lea.vmem %s6, 6
        %v652 = vld [vmem:[%s651] sm:$0x3]
        %v654 = vlaneseq
        %v655 = vshrl.u32 %v654, 7
        %v656 = vsub.s32 0, %v655
        %v657 = vrot.slane %v652, %v656
        %v658 = vlaneseq
        %v659 = vshrl.u32 %v658, 7
        %v660 = vsub.s32 1, %v659
        %v661 = vrot.slane %v652, %v660
        %v664 = vmul.f32 %v647, %v657
        %v665 = vmul.f32 %v648, %v661
        %667 = vset.pattern.permute.xlu0 0
        %668 = vperm.xlu0 %667, %v650
        %v669 = vpop.permute.xlu0 %668
        %v671 = vmul.f32 %v664, %v669
        %v672 = vmul.f32 %v665, %v669
        %v673 = vadd.f32 %v640, %v671
        %v674 = vadd.f32 %v641, %v672
        %v675 = vld [vmem:[%s7] sm:$0xf]
        %v676 = vpack.c.bf16 %v673, %v673
        %v677 = vpack.c.bf16 %v674, %v674
        %v678 = vld [vmem:[%s8] sm:$0xff]
        %v679 = vld [vmem:[%s11] sm:$0xff]
        %681 = vset.pattern.permute.xlu0 0
        %682 = vperm.xlu0 %681, %v678
        %v683 = vpop.permute.xlu0 %682
        %vm685 = vcmask 64512
        %v687 = vsel %vm685, %v675, 0
        %vm689 = vcmask 1043456
        %v691 = vsel %vm689, %v676, 0
        %v694 = vsel %vm689, %v677, 0
        %696 = vmatprep.subr.bf16.mxu0 %v694
        %697 = vmatpush1.bf16.msra.mxu0 %v691
        %698 = vmatprep.subr.bf16.mxu0 0
        %699 = vmatpush1.bf16.msra.mxu0 0
        %700 = vmatprep.subr.bf16.mxu0 0
        %701 = vmatpush1.bf16.msra.mxu0 0
        %702 = vmatprep.subr.bf16.mxu0 0
        %703 = vmatpush1.bf16.msra.mxu0 0
        %704 = vmatprep.subr.bf16.mxu0 0
        %705 = vmatpush1.bf16.msra.mxu0 0
        %706 = vmatprep.subr.bf16.mxu0 0
        %707 = vmatpush1.bf16.msra.mxu0 0
        %708 = vmatprep.subr.bf16.mxu0 0
        %709 = vmatpush1.bf16.msra.mxu0 0
        %710 = vmatprep.subr.bf16.mxu0 0
        %711 = vmatpush1.bf16.msra.mxu0 0
        %712 = vmatprep.subr.bf16.mxu0 0
        %713 = vmatpush1.bf16.msra.mxu0 0
        %714 = vmatprep.subr.bf16.mxu0 0
        %715 = vmatpush1.bf16.msra.mxu0 0
        %716 = vmatprep.subr.bf16.mxu0 0
        %717 = vmatpush1.bf16.msra.mxu0 0
        %718 = vmatprep.subr.bf16.mxu0 0
        %719 = vmatpush1.bf16.msra.mxu0 0
        %720 = vmatprep.subr.bf16.mxu0 0
        %721 = vmatpush1.bf16.msra.mxu0 0
        %722 = vmatprep.subr.bf16.mxu0 0
        %723 = vmatpush1.bf16.msra.mxu0 0
        %724 = vmatprep.subr.bf16.mxu0 0
        %725 = vmatpush1.bf16.msra.mxu0 0
        %726 = vmatprep.subr.bf16.mxu0 0
        %727 = vmatpush1.bf16.msra.mxu0 0
        %728 = vmatprep.mubr.bf16.mxu0 0
        %729 = vmatmul.mubr.bf16.gmra.mrb[0].mxu0 %v687
        %v730 = vpop.f32.mrb[0].mxu0
        %v731 = vadd.f32 %v683, %v730
        %v732 = vpop.f32.mrb[0].mxu0
        %v733 = vadd.f32 %v683, %v732
        %v734 = vpop.f32.mrb[0].mxu0
        %v735 = vpop.f32.mrb[0].mxu0
        %736 = vdwg.mxu0
        %v737 = vmax.f32 %v731, 0.0
        %v738 = vmax.f32 %v733, 0.0
        %739 = vrot.lane.b32.xlu0 %v737, 1
        %v740 = vpop.permute.xlu0 %739
        %741 = vrot.lane.b32.xlu0 %v738, 1
        %v742 = vpop.permute.xlu0 %741
        %v743 = vsel %vm437, %v740, %v742
        %v744 = vsel %vm437, %v742, %v740
        %v745 = vld [vmem:[%s9] sm:$0xff]
        %v746 = vmul.f32 %v744, %v446
        %v747 = vmul.f32 %v743, %v450
        %749 = vset.pattern.permute.xlu0 0
        %750 = vperm.xlu0 %749, %v745
        %v751 = vpop.permute.xlu0 %750
        %v753 = vmul.f32 %v746, %v751
        %v754 = vmul.f32 %v747, %v751
        %s755 = scalar_lea.vmem %s9, 8
        %v756 = vld [vmem:[%s755] sm:$0xff]
        %v757 = vmul.f32 %v737, %v470
        %v758 = vmul.f32 %v738, %v474
        %760 = vset.pattern.permute.xlu0 0
        %761 = vperm.xlu0 %760, %v756
        %v762 = vpop.permute.xlu0 %761
        %v764 = vmul.f32 %v757, %v762
        %v765 = vmul.f32 %v758, %v762
        %v766 = vadd.f32 %v753, %v764
        %v767 = vadd.f32 %v754, %v765
        %768 = vrot.lane.b32.xlu0 %v737, 127
        %v769 = vpop.permute.xlu0 %768
        %770 = vrot.lane.b32.xlu0 %v738, 127
        %v771 = vpop.permute.xlu0 %770
        %v772 = vsel %vm492, %v769, %v771
        %v773 = vsel %vm492, %v771, %v769
        %s774 = scalar_lea.vmem %s9, 16
        %v775 = vld [vmem:[%s774] sm:$0xff]
        %v776 = vmul.f32 %v772, %v503
        %v777 = vmul.f32 %v773, %v507
        %779 = vset.pattern.permute.xlu0 0
        %780 = vperm.xlu0 %779, %v775
        %v781 = vpop.permute.xlu0 %780
        %v783 = vmul.f32 %v776, %v781
        %v784 = vmul.f32 %v777, %v781
        %v785 = vadd.f32 %v766, %v783
        %v786 = vadd.f32 %v767, %v784
        %787 = vrot.lane.b32.xlu0 %v737, 126
        %v788 = vpop.permute.xlu0 %787
        %789 = vrot.lane.b32.xlu0 %v738, 126
        %v790 = vpop.permute.xlu0 %789
        %v791 = vsel %vm525, %v788, %v790
        %v792 = vsel %vm525, %v790, %v788
        %s793 = scalar_lea.vmem %s9, 24
        %v794 = vld [vmem:[%s793] sm:$0xff]
        %v795 = vmul.f32 %v791, %v536
        %v796 = vmul.f32 %v792, %v540
        %798 = vset.pattern.permute.xlu0 0
        %799 = vperm.xlu0 %798, %v794
        %v800 = vpop.permute.xlu0 %799
        %v802 = vmul.f32 %v795, %v800
        %v803 = vmul.f32 %v796, %v800
        %v804 = vadd.f32 %v785, %v802
        %v805 = vadd.f32 %v786, %v803
        %806 = vrot.lane.b32.xlu0 %v804, 16
        %v807 = vpop.permute.xlu0 %806
        %808 = vrot.lane.b32.xlu0 %v805, 16
        %v809 = vpop.permute.xlu0 %808
        %v810 = vsel %vm558, %v807, %v809
        %v811 = vsel %vm558, %v809, %v807
        %v812 = vld [vmem:[%s10] sm:$0xff]
        %v813 = vmul.f32 %v811, %v567
        %v814 = vmul.f32 %v810, %v571
        %816 = vset.pattern.permute.xlu0 0
        %817 = vperm.xlu0 %816, %v812
        %v818 = vpop.permute.xlu0 %817
        %v820 = vmul.f32 %v813, %v818
        %v821 = vmul.f32 %v814, %v818
        %s822 = scalar_lea.vmem %s10, 8
        %v823 = vld [vmem:[%s822] sm:$0xff]
        %v824 = vmul.f32 %v804, %v591
        %v825 = vmul.f32 %v805, %v595
        %827 = vset.pattern.permute.xlu0 0
        %828 = vperm.xlu0 %827, %v823
        %v829 = vpop.permute.xlu0 %828
        %v831 = vmul.f32 %v824, %v829
        %v832 = vmul.f32 %v825, %v829
        %v833 = vadd.f32 %v820, %v831
        %v834 = vadd.f32 %v821, %v832
        %835 = vrot.lane.b32.xlu0 %v804, 112
        %v836 = vpop.permute.xlu0 %835
        %837 = vrot.lane.b32.xlu0 %v805, 112
        %v838 = vpop.permute.xlu0 %837
        %v839 = vsel %vm613, %v836, %v838
        %v840 = vsel %vm613, %v838, %v836
        %s841 = scalar_lea.vmem %s10, 16
        %v842 = vld [vmem:[%s841] sm:$0xff]
        %v843 = vmul.f32 %v839, %v624
        %v844 = vmul.f32 %v840, %v628
        %846 = vset.pattern.permute.xlu0 0
        %847 = vperm.xlu0 %846, %v842
        %v848 = vpop.permute.xlu0 %847
        %v850 = vmul.f32 %v843, %v848
        %v851 = vmul.f32 %v844, %v848
        %v852 = vadd.f32 %v833, %v850
        %v853 = vadd.f32 %v834, %v851
        %854 = vrot.lane.b32.xlu0 %v804, 96
        %v855 = vpop.permute.xlu0 %854
        %856 = vrot.lane.b32.xlu0 %v805, 96
        %v857 = vpop.permute.xlu0 %856
        %v858 = vsel %vm646, %v855, %v857
        %v859 = vsel %vm646, %v857, %v855
        %s860 = scalar_lea.vmem %s10, 24
        %v861 = vld [vmem:[%s860] sm:$0xff]
        %v862 = vmul.f32 %v858, %v657
        %v863 = vmul.f32 %v859, %v661
        %865 = vset.pattern.permute.xlu0 0
        %866 = vperm.xlu0 %865, %v861
        %v867 = vpop.permute.xlu0 %866
        %v869 = vmul.f32 %v862, %v867
        %v870 = vmul.f32 %v863, %v867
        %v871 = vadd.f32 %v852, %v869
        %v872 = vadd.f32 %v853, %v870
        %874 = vset.pattern.permute.xlu0 0
        %875 = vperm.xlu0 %874, %v679
        %v876 = vpop.permute.xlu0 %875
        %v878 = vadd.f32 %v871, %v876
        %v879 = vadd.f32 %v872, %v876
        %880 = vst [vmem:[%s406] sm:$0xff] %v878
        %881 = vst [vmem:[%s406 + $0x8] sm:$0xff] %v879
        %s882 = sand.u32 %s291, 1
        %s883 = scalar_lea.sflag [#allocation3], %s882
        %s884 = sand.u32 %s291, 1
        %s885 = smul.addr %s884, 16
        %s886 = scalar_lea.vmem [#allocation2], %s885
        // Predicated region
        $region69: #{tpu_custom_call.1} parent=67 // pred_check
          %p887 = pneg %p301
        $region70: #{tpu_custom_call.1} parent=67 // pred_check_branch
          %889 = sbr.rel (%p887) target = $region72
        $region71: #{tpu_custom_call.1} parent=67 // pred_region
          %s891 = ssub.s32 256, 256
          %892 = vsyncadd %s883, %s891
          %s893 = smul.addr %s26, 2
          %s894 = smul.addr %s893, 128
          %s895 = scalar_lea.hbm %s12, %s894
          %s897 = sshll.u32 %s886, 4
          %s898 = int_to_ptr.vmem [resolvable:$true] %s897
          %900 = dma.vmem_to_hbm [thread:$0]  %s898, 256, %s895, %s883
        $region72: #{tpu_custom_call.1} parent=67 // pred_fallthru
          _
      $region68: #{tpu_custom_call.1} parent=5 // pred_fallthru
        _
      %p901 = scmp.le.s32.totalorder 2, %s21
      // Predicated region
      $region73: #{tpu_custom_call.1} parent=5 // pred_check
        %p902 = pneg %p901
      $region74: #{tpu_custom_call.1} parent=5 // pred_check_branch
        %904 = sbr.rel (%p902) target = $region76
      $region75: #{tpu_custom_call.1} parent=5 // pred_region
        %s905 = ssub.s32 %s21, 2
        // Predicated region
        $region77: #{tpu_custom_call.1} parent=75 // pred_check
          %p906 = pneg %p307
        $region78: #{tpu_custom_call.1} parent=75 // pred_check_branch
          %908 = sbr.rel (%p906) target = $region80
        $region79: #{tpu_custom_call.1} parent=75 // pred_region
          %s909 = sand.u32 %s292, 1
          %s910 = scalar_lea.sflag [#allocation3], %s909
          %s911 = sand.u32 %s292, 1
          %s912 = smul.addr %s911, 16
          %s913 = scalar_lea.vmem [#allocation2], %s912
          %914 = dma.done %s910, 256
        $region80: #{tpu_custom_call.1} parent=75 // pred_fallthru
          _
      $region76: #{tpu_custom_call.1} parent=5 // pred_fallthru
        _
    $region6: #{tpu_custom_call.1} parent=1 // loop_footer
      %s25 = sadd.s32 1, %s21
    $region7: #{tpu_custom_call.1} parent=1 // loop_footer_branch
      %20 = sbr.rel target = $region3
    $region8: #{tpu_custom_call.1} parent=1 // loop_exit
      _
    %915 = vsyncpa [#allocation3], 1
    %s916 = scalar_lea.sflag [#allocation3], 1
    %917 = vsyncpa %s916, 1

</llo_original>
